<compile_context>
chip_gen: v5e
topology: v5e:2x2
jax: 0.10.0
libtpu: 0.0.40
codegen_flags: <defaults>
</compile_context>

<pallas_src>
import functools

import jax
import jax.numpy as jnp
from jax.experimental import pallas as pl
from jax.experimental.pallas import tpu as pltpu


def _round_up(x, m):
    return ((x + m - 1) // m) * m


def _fca_kernel(q_ref, k_ref, o_ref, *, inv_scale, activation):
    # Block layout (lane-dense over the fused batch*head axis):
    #   q_ref: [2, E, Mq, T]   (plane, feature, query mode, head-lane)
    #   k_ref: [2, E, Mk, T]
    #   o_ref: [2, E, F,  T]   with F = L//2 + 1 > Mq; bins >= Mq are zero-filled here.
    _, E, Mq, T = q_ref.shape
    Mk = k_ref.shape[2]
    F = o_ref.shape[2]

    qr = q_ref[0]   # [E, Mq, T]
    qi = q_ref[1]
    kr = k_ref[0]   # [E, Mk, T]
    ki = k_ref[1]

    # Stage 1: xqk_ft[x, y, g] = sum_e q[e, x, g] * k[e, y, g]
    # (complex, non-conjugated -- matches compl_mul1d('bhex,bhey->bhxy')).
    # E is small and static -> unrolled broadcast-FMA chain, fully lane-parallel
    # across T heads per vreg (no MXU, no in-kernel transposes).
    ar = jnp.zeros((Mq, Mk, T), jnp.float32)
    ai = jnp.zeros((Mq, Mk, T), jnp.float32)
    for e in range(E):
        qre = qr[e][:, None, :]   # [Mq, 1, T]
        qie = qi[e][:, None, :]
        kre = kr[e][None, :, :]   # [1, Mk, T]
        kie = ki[e][None, :, :]
        ar = ar + (qre * kre - qie * kie)
        ai = ai + (qre * kie + qie * kre)

    if activation == "tanh":
        # Applied independently to real / imaginary parts (EUP transcendentals).
        ar = jnp.tanh(ar)
        ai = jnp.tanh(ai)
    else:  # 'softmax': softmax over the key-mode axis of |xqk_ft|, imaginary part -> 0.
        amp = jnp.sqrt(ar * ar + ai * ai)                 # [Mq, Mk, T]
        m = jnp.max(amp, axis=1, keepdims=True)           # sublane (XLU) reduce
        w = jnp.exp(amp - m)                              # EUP
        ar = w / jnp.sum(w, axis=1, keepdims=True)
        ai = jnp.zeros_like(ar)

    # Stage 2: xqkv_ft[e, x, g] = sum_y xqk_ft[x, y, g] * k[e, y, g]  (complex).
    # Multiplies on the VPU, y-reduction on the XLU (sublane reduce, free slot).
    out_r = []
    out_i = []
    for e in range(E):
        kre = kr[e][None, :, :]   # [1, Mk, T]
        kie = ki[e][None, :, :]
        out_r.append(jnp.sum(ar * kre - ai * kie, axis=1))   # [Mq, T]
        out_i.append(jnp.sum(ar * kie + ai * kre, axis=1))   # [Mq, T]
    # Fold in the 1 / (in_channels * out_channels) scaling (the irfft is linear).
    out_r = jnp.stack(out_r, axis=0) * inv_scale              # [E, Mq, T]
    out_i = jnp.stack(out_i, axis=0) * inv_scale

    # Attended modes + zero-filled remaining rfft bins, written as ONE full-block
    # lane-dense store so the wrapper can irfft directly.
    attended = jnp.stack([out_r, out_i], axis=0)               # [2, E, Mq, T]
    if F > Mq:
        tail = jnp.zeros((2, E, F - Mq, T), jnp.float32)
        o_ref[...] = jnp.concatenate([attended, tail], axis=2)
    else:
        o_ref[...] = attended


def fourier_cross_attention_w(q, k, v, *, in_channels, out_channels,
                              modes=16, activation="tanh", lane_tile=None):
    """q, k, v: [B, L, E, H] / [B, S, E, H] float32.  Returns ([B, L, H, E], None)."""
    if activation not in ("tanh", "softmax"):
        raise ValueError(f"Activation function '{activation}' is not implemented.")
    del v  # v is never used by the PyTorch forward (only permuted, then discarded).

    B, L, E, H = q.shape
    _, S, _, _ = k.shape
    Mq = min(L // 2, modes)
    Mk = min(S // 2, modes)
    F = L // 2 + 1
    G = B * H

    # Lane tile: at least 128 (full vreg lane width); widen when many heads are
    # available to amortize per-grid-step overhead, but keep >=2 grid steps possible
    # so both v7x TensorCores get work when G is large.  Also cap it so the
    # double-buffered block footprint stays well under the default scoped-VMEM limit
    # (matters for long sequences where F = L//2 + 1 is large).
    if lane_tile is None:
        if G > 1024:
            lane_tile = 512
        elif G > 256:
            lane_tile = 256
        else:
            lane_tile = 128
        bytes_per_col = 4 * 2 * E * (Mq + Mk + F) * 2   # f32, 2 planes, double-buffered
        while lane_tile > 128 and bytes_per_col * lane_tile > (20 << 20):
            lane_tile //= 2
    Gp = _round_up(G, lane_tile)

    # Glue: rfft along the native time axis (no Pallas FFT primitive). Doing the FFT
    # on axis=1 avoids transposing the full time-domain tensors.
    xq_ft = jnp.fft.rfft(q.astype(jnp.float32), axis=1)[:, :Mq]   # [B, Mq, E, H] c64
    xk_ft = jnp.fft.rfft(k.astype(jnp.float32), axis=1)[:, :Mk]   # [B, Mk, E, H] c64

    def pack(x_ft, M):
        # [B, M, E, H] complex -> [2, E, M, Gp] float32 (real/imag stacked, heads last).
        x = jnp.stack([jnp.real(x_ft), jnp.imag(x_ft)], axis=0)    # [2, B, M, E, H]
        x = jnp.transpose(x, (0, 3, 2, 1, 4)).reshape(2, E, M, G)  # [2, E, M, G]
        if Gp > G:
            x = jnp.pad(x, ((0, 0), (0, 0), (0, 0), (0, Gp - G)))
        return x.astype(jnp.float32)

    q_ri = pack(xq_ft, Mq)
    k_ri = pack(xk_ft, Mk)

    inv_scale = 1.0 / float(in_channels * out_channels)
    kernel = functools.partial(_fca_kernel, inv_scale=inv_scale, activation=activation)

    grid = (Gp // lane_tile,)
    out_ri = pl.pallas_call(
        kernel,
        out_shape=jax.ShapeDtypeStruct((2, E, F, Gp), jnp.float32),
        grid_spec=pltpu.PrefetchScalarGridSpec(
            num_scalar_prefetch=0,
            grid=grid,
            in_specs=[
                pl.BlockSpec((2, E, Mq, lane_tile), lambda g: (0, 0, 0, g)),
                pl.BlockSpec((2, E, Mk, lane_tile), lambda g: (0, 0, 0, g)),
            ],
            out_specs=pl.BlockSpec((2, E, F, lane_tile), lambda g: (0, 0, 0, g)),
        ),
        compiler_params=pltpu.CompilerParams(
            dimension_semantics=("parallel",)),
    )(q_ri, k_ri)

    # Glue: back to complex, undo the head packing, irfft along the frequency axis.
    out_c = (out_ri[0, :, :, :G] + 1j * out_ri[1, :, :, :G]).astype(jnp.complex64)
    out_c = out_c.reshape(E, F, B, H)                  # [E, F, B, H]
    out_c = jnp.transpose(out_c, (2, 1, 3, 0))         # [B, F, H, E]
    out = jnp.fft.irfft(out_c, n=L, axis=1)            # [B, L, H, E]
    return out, None


def _reference(q, k, *, in_channels, out_channels, modes):
    """Pure-JAX reference mirroring the PyTorch forward (tanh activation)."""
    B, L, E, H = q.shape
    _, S, _, _ = k.shape
    Mq = min(L // 2, modes)
    Mk = min(S // 2, modes)
    xq = jnp.transpose(q, (0, 3, 2, 1))
    xk = jnp.transpose(k, (0, 3, 2, 1))
    xq_ft = jnp.fft.rfft(xq, axis=-1)[..., :Mq]
    xk_ft = jnp.fft.rfft(xk, axis=-1)[..., :Mk]
    xqk = jnp.einsum("bhex,bhey->bhxy", xq_ft, xk_ft)
    xqk = jnp.tanh(jnp.real(xqk)) + 1j * jnp.tanh(jnp.imag(xqk))
    xqkv = jnp.einsum("bhxy,bhey->bhex", xqk, xk_ft)
    out_ft = jnp.zeros((B, H, E, L // 2 + 1), dtype=jnp.complex64)
    out_ft = out_ft.at[..., :Mq].set(xqkv.astype(jnp.complex64))
    out = jnp.fft.irfft(out_ft / (in_channels * out_channels), n=L, axis=-1)
    return jnp.transpose(out, (0, 3, 1, 2))


if __name__ == "__main__":
    # Small shapes consistent with the module's forward: q/k/v are [B, L, E, H].
    B, L, S, E, H = 2, 16, 16, 8, 4
    in_channels = out_channels = 8
    modes = 16

    key = jax.random.PRNGKey(0)
    kq, kk, kv = jax.random.split(key, 3)
    q = jax.random.normal(kq, (B, L, E, H), dtype=jnp.float32)
    k = jax.random.normal(kk, (B, S, E, H), dtype=jnp.float32)
    v = jax.random.normal(kv, (B, S, E, H), dtype=jnp.float32)

    out, _ = fourier_cross_attention_w(
        q, k, v, in_channels=in_channels, out_channels=out_channels,
        modes=modes, activation="tanh")
    out = jax.block_until_ready(out)

    ref = jax.block_until_ready(
        _reference(q, k, in_channels=in_channels, out_channels=out_channels, modes=modes))

    assert out.shape == (B, L, H, E), out.shape
    max_err = float(jnp.max(jnp.abs(out - ref)))
    assert max_err < 2e-2, f"max abs error {max_err}"
    print("KERNEL_OK")
</pallas_src>

<mosaic_0001>
module attributes {stable_mosaic.version = 11 : i64} {
  func.func @_fca_kernel(%arg0: i32, %arg1: memref<2x8x8x128xf32, #tpu.memory_space<vmem>>, %arg2: memref<2x8x8x128xf32, #tpu.memory_space<vmem>>, %arg3: memref<2x8x9x128xf32, #tpu.memory_space<vmem>>) attributes {dimension_semantics = [#tpu.dimension_semantics<parallel>], iteration_bounds = array<i64: 1>, scalar_prefetch = 0 : i64, scratch_operands = 0 : i64, tpu.core_type = #tpu.core_type<tc>, window_params = [{transform_indices = @transform_0, window_bounds = array<i64: 2, 8, 8, 128>}, {transform_indices = @transform_1, window_bounds = array<i64: 2, 8, 8, 128>}, {transform_indices = @transform_2, window_bounds = array<i64: 2, 8, 9, 128>}]} {
    %c0 = arith.constant 0 : index
    %c0_0 = arith.constant 0 : index
    %c0_1 = arith.constant 0 : index
    %c0_2 = arith.constant 0 : index
    %0 = vector.load %arg1[%c0, %c0_0, %c0_1, %c0_2] : memref<2x8x8x128xf32, #tpu.memory_space<vmem>>, vector<1x8x8x128xf32>
    %1 = vector.shape_cast %0 : vector<1x8x8x128xf32> to vector<8x8x128xf32>
    %c1 = arith.constant 1 : index
    %c0_3 = arith.constant 0 : index
    %c0_4 = arith.constant 0 : index
    %c0_5 = arith.constant 0 : index
    %2 = vector.load %arg1[%c1, %c0_3, %c0_4, %c0_5] : memref<2x8x8x128xf32, #tpu.memory_space<vmem>>, vector<1x8x8x128xf32>
    %3 = vector.shape_cast %2 : vector<1x8x8x128xf32> to vector<8x8x128xf32>
    %c0_6 = arith.constant 0 : index
    %c0_7 = arith.constant 0 : index
    %c0_8 = arith.constant 0 : index
    %c0_9 = arith.constant 0 : index
    %4 = vector.load %arg2[%c0_6, %c0_7, %c0_8, %c0_9] : memref<2x8x8x128xf32, #tpu.memory_space<vmem>>, vector<1x8x8x128xf32>
    %5 = vector.shape_cast %4 : vector<1x8x8x128xf32> to vector<8x8x128xf32>
    %c1_10 = arith.constant 1 : index
    %c0_11 = arith.constant 0 : index
    %c0_12 = arith.constant 0 : index
    %c0_13 = arith.constant 0 : index
    %6 = vector.load %arg2[%c1_10, %c0_11, %c0_12, %c0_13] : memref<2x8x8x128xf32, #tpu.memory_space<vmem>>, vector<1x8x8x128xf32>
    %7 = vector.shape_cast %6 : vector<1x8x8x128xf32> to vector<8x8x128xf32>
    %cst = arith.constant 0.000000e+00 : f32
    %8 = vector.broadcast %cst : f32 to vector<8x8x128xf32>
    %cst_14 = arith.constant 0.000000e+00 : f32
    %9 = vector.broadcast %cst_14 : f32 to vector<8x8x128xf32>
    %10 = vector.extract_strided_slice %1 {offsets = [0, 0, 0], sizes = [1, 8, 128], strides = [1, 1, 1]} : vector<8x8x128xf32> to vector<1x8x128xf32>
    %11 = vector.shape_cast %10 : vector<1x8x128xf32> to vector<8x128xf32>
    %12 = vector.shape_cast %11 : vector<8x128xf32> to vector<8x1x128xf32>
    %13 = vector.extract_strided_slice %3 {offsets = [0, 0, 0], sizes = [1, 8, 128], strides = [1, 1, 1]} : vector<8x8x128xf32> to vector<1x8x128xf32>
    %14 = vector.shape_cast %13 : vector<1x8x128xf32> to vector<8x128xf32>
    %15 = vector.shape_cast %14 : vector<8x128xf32> to vector<8x1x128xf32>
    %16 = vector.extract_strided_slice %5 {offsets = [0, 0, 0], sizes = [1, 8, 128], strides = [1, 1, 1]} : vector<8x8x128xf32> to vector<1x8x128xf32>
    %17 = vector.shape_cast %16 : vector<1x8x128xf32> to vector<8x128xf32>
    %18 = vector.shape_cast %17 : vector<8x128xf32> to vector<1x8x128xf32>
    %19 = vector.extract_strided_slice %7 {offsets = [0, 0, 0], sizes = [1, 8, 128], strides = [1, 1, 1]} : vector<8x8x128xf32> to vector<1x8x128xf32>
    %20 = vector.shape_cast %19 : vector<1x8x128xf32> to vector<8x128xf32>
    %21 = vector.shape_cast %20 : vector<8x128xf32> to vector<1x8x128xf32>
    %22 = vector.broadcast %12 : vector<8x1x128xf32> to vector<8x8x128xf32>
    %23 = vector.broadcast %18 : vector<1x8x128xf32> to vector<8x8x128xf32>
    %24 = arith.mulf %22, %23 : vector<8x8x128xf32>
    %25 = vector.broadcast %15 : vector<8x1x128xf32> to vector<8x8x128xf32>
    %26 = vector.broadcast %21 : vector<1x8x128xf32> to vector<8x8x128xf32>
    %27 = arith.mulf %25, %26 : vector<8x8x128xf32>
    %28 = arith.subf %24, %27 : vector<8x8x128xf32>
    %29 = arith.addf %8, %28 : vector<8x8x128xf32>
    %30 = vector.broadcast %12 : vector<8x1x128xf32> to vector<8x8x128xf32>
    %31 = vector.broadcast %21 : vector<1x8x128xf32> to vector<8x8x128xf32>
    %32 = arith.mulf %30, %31 : vector<8x8x128xf32>
    %33 = vector.broadcast %15 : vector<8x1x128xf32> to vector<8x8x128xf32>
    %34 = vector.broadcast %18 : vector<1x8x128xf32> to vector<8x8x128xf32>
    %35 = arith.mulf %33, %34 : vector<8x8x128xf32>
    %36 = arith.addf %32, %35 : vector<8x8x128xf32>
    %37 = arith.addf %9, %36 : vector<8x8x128xf32>
    %38 = vector.extract_strided_slice %1 {offsets = [1, 0, 0], sizes = [1, 8, 128], strides = [1, 1, 1]} : vector<8x8x128xf32> to vector<1x8x128xf32>
    %39 = vector.shape_cast %38 : vector<1x8x128xf32> to vector<8x128xf32>
    %40 = vector.shape_cast %39 : vector<8x128xf32> to vector<8x1x128xf32>
    %41 = vector.extract_strided_slice %3 {offsets = [1, 0, 0], sizes = [1, 8, 128], strides = [1, 1, 1]} : vector<8x8x128xf32> to vector<1x8x128xf32>
    %42 = vector.shape_cast %41 : vector<1x8x128xf32> to vector<8x128xf32>
    %43 = vector.shape_cast %42 : vector<8x128xf32> to vector<8x1x128xf32>
    %44 = vector.extract_strided_slice %5 {offsets = [1, 0, 0], sizes = [1, 8, 128], strides = [1, 1, 1]} : vector<8x8x128xf32> to vector<1x8x128xf32>
    %45 = vector.shape_cast %44 : vector<1x8x128xf32> to vector<8x128xf32>
    %46 = vector.shape_cast %45 : vector<8x128xf32> to vector<1x8x128xf32>
    %47 = vector.extract_strided_slice %7 {offsets = [1, 0, 0], sizes = [1, 8, 128], strides = [1, 1, 1]} : vector<8x8x128xf32> to vector<1x8x128xf32>
    %48 = vector.shape_cast %47 : vector<1x8x128xf32> to vector<8x128xf32>
    %49 = vector.shape_cast %48 : vector<8x128xf32> to vector<1x8x128xf32>
    %50 = vector.broadcast %40 : vector<8x1x128xf32> to vector<8x8x128xf32>
    %51 = vector.broadcast %46 : vector<1x8x128xf32> to vector<8x8x128xf32>
    %52 = arith.mulf %50, %51 : vector<8x8x128xf32>
    %53 = vector.broadcast %43 : vector<8x1x128xf32> to vector<8x8x128xf32>
    %54 = vector.broadcast %49 : vector<1x8x128xf32> to vector<8x8x128xf32>
    %55 = arith.mulf %53, %54 : vector<8x8x128xf32>
    %56 = arith.subf %52, %55 : vector<8x8x128xf32>
    %57 = arith.addf %29, %56 : vector<8x8x128xf32>
    %58 = vector.broadcast %40 : vector<8x1x128xf32> to vector<8x8x128xf32>
    %59 = vector.broadcast %49 : vector<1x8x128xf32> to vector<8x8x128xf32>
    %60 = arith.mulf %58, %59 : vector<8x8x128xf32>
    %61 = vector.broadcast %43 : vector<8x1x128xf32> to vector<8x8x128xf32>
    %62 = vector.broadcast %46 : vector<1x8x128xf32> to vector<8x8x128xf32>
    %63 = arith.mulf %61, %62 : vector<8x8x128xf32>
    %64 = arith.addf %60, %63 : vector<8x8x128xf32>
    %65 = arith.addf %37, %64 : vector<8x8x128xf32>
    %66 = vector.extract_strided_slice %1 {offsets = [2, 0, 0], sizes = [1, 8, 128], strides = [1, 1, 1]} : vector<8x8x128xf32> to vector<1x8x128xf32>
    %67 = vector.shape_cast %66 : vector<1x8x128xf32> to vector<8x128xf32>
    %68 = vector.shape_cast %67 : vector<8x128xf32> to vector<8x1x128xf32>
    %69 = vector.extract_strided_slice %3 {offsets = [2, 0, 0], sizes = [1, 8, 128], strides = [1, 1, 1]} : vector<8x8x128xf32> to vector<1x8x128xf32>
    %70 = vector.shape_cast %69 : vector<1x8x128xf32> to vector<8x128xf32>
    %71 = vector.shape_cast %70 : vector<8x128xf32> to vector<8x1x128xf32>
    %72 = vector.extract_strided_slice %5 {offsets = [2, 0, 0], sizes = [1, 8, 128], strides = [1, 1, 1]} : vector<8x8x128xf32> to vector<1x8x128xf32>
    %73 = vector.shape_cast %72 : vector<1x8x128xf32> to vector<8x128xf32>
    %74 = vector.shape_cast %73 : vector<8x128xf32> to vector<1x8x128xf32>
    %75 = vector.extract_strided_slice %7 {offsets = [2, 0, 0], sizes = [1, 8, 128], strides = [1, 1, 1]} : vector<8x8x128xf32> to vector<1x8x128xf32>
    %76 = vector.shape_cast %75 : vector<1x8x128xf32> to vector<8x128xf32>
    %77 = vector.shape_cast %76 : vector<8x128xf32> to vector<1x8x128xf32>
    %78 = vector.broadcast %68 : vector<8x1x128xf32> to vector<8x8x128xf32>
    %79 = vector.broadcast %74 : vector<1x8x128xf32> to vector<8x8x128xf32>
    %80 = arith.mulf %78, %79 : vector<8x8x128xf32>
    %81 = vector.broadcast %71 : vector<8x1x128xf32> to vector<8x8x128xf32>
    %82 = vector.broadcast %77 : vector<1x8x128xf32> to vector<8x8x128xf32>
    %83 = arith.mulf %81, %82 : vector<8x8x128xf32>
    %84 = arith.subf %80, %83 : vector<8x8x128xf32>
    %85 = arith.addf %57, %84 : vector<8x8x128xf32>
    %86 = vector.broadcast %68 : vector<8x1x128xf32> to vector<8x8x128xf32>
    %87 = vector.broadcast %77 : vector<1x8x128xf32> to vector<8x8x128xf32>
    %88 = arith.mulf %86, %87 : vector<8x8x128xf32>
    %89 = vector.broadcast %71 : vector<8x1x128xf32> to vector<8x8x128xf32>
    %90 = vector.broadcast %74 : vector<1x8x128xf32> to vector<8x8x128xf32>
    %91 = arith.mulf %89, %90 : vector<8x8x128xf32>
    %92 = arith.addf %88, %91 : vector<8x8x128xf32>
    %93 = arith.addf %65, %92 : vector<8x8x128xf32>
    %94 = vector.extract_strided_slice %1 {offsets = [3, 0, 0], sizes = [1, 8, 128], strides = [1, 1, 1]} : vector<8x8x128xf32> to vector<1x8x128xf32>
    %95 = vector.shape_cast %94 : vector<1x8x128xf32> to vector<8x128xf32>
    %96 = vector.shape_cast %95 : vector<8x128xf32> to vector<8x1x128xf32>
    %97 = vector.extract_strided_slice %3 {offsets = [3, 0, 0], sizes = [1, 8, 128], strides = [1, 1, 1]} : vector<8x8x128xf32> to vector<1x8x128xf32>
    %98 = vector.shape_cast %97 : vector<1x8x128xf32> to vector<8x128xf32>
    %99 = vector.shape_cast %98 : vector<8x128xf32> to vector<8x1x128xf32>
    %100 = vector.extract_strided_slice %5 {offsets = [3, 0, 0], sizes = [1, 8, 128], strides = [1, 1, 1]} : vector<8x8x128xf32> to vector<1x8x128xf32>
    %101 = vector.shape_cast %100 : vector<1x8x128xf32> to vector<8x128xf32>
    %102 = vector.shape_cast %101 : vector<8x128xf32> to vector<1x8x128xf32>
    %103 = vector.extract_strided_slice %7 {offsets = [3, 0, 0], sizes = [1, 8, 128], strides = [1, 1, 1]} : vector<8x8x128xf32> to vector<1x8x128xf32>
    %104 = vector.shape_cast %103 : vector<1x8x128xf32> to vector<8x128xf32>
    %105 = vector.shape_cast %104 : vector<8x128xf32> to vector<1x8x128xf32>
    %106 = vector.broadcast %96 : vector<8x1x128xf32> to vector<8x8x128xf32>
    %107 = vector.broadcast %102 : vector<1x8x128xf32> to vector<8x8x128xf32>
    %108 = arith.mulf %106, %107 : vector<8x8x128xf32>
    %109 = vector.broadcast %99 : vector<8x1x128xf32> to vector<8x8x128xf32>
    %110 = vector.broadcast %105 : vector<1x8x128xf32> to vector<8x8x128xf32>
    %111 = arith.mulf %109, %110 : vector<8x8x128xf32>
    %112 = arith.subf %108, %111 : vector<8x8x128xf32>
    %113 = arith.addf %85, %112 : vector<8x8x128xf32>
    %114 = vector.broadcast %96 : vector<8x1x128xf32> to vector<8x8x128xf32>
    %115 = vector.broadcast %105 : vector<1x8x128xf32> to vector<8x8x128xf32>
    %116 = arith.mulf %114, %115 : vector<8x8x128xf32>
    %117 = vector.broadcast %99 : vector<8x1x128xf32> to vector<8x8x128xf32>
    %118 = vector.broadcast %102 : vector<1x8x128xf32> to vector<8x8x128xf32>
    %119 = arith.mulf %117, %118 : vector<8x8x128xf32>
    %120 = arith.addf %116, %119 : vector<8x8x128xf32>
    %121 = arith.addf %93, %120 : vector<8x8x128xf32>
    %122 = vector.extract_strided_slice %1 {offsets = [4, 0, 0], sizes = [1, 8, 128], strides = [1, 1, 1]} : vector<8x8x128xf32> to vector<1x8x128xf32>
    %123 = vector.shape_cast %122 : vector<1x8x128xf32> to vector<8x128xf32>
    %124 = vector.shape_cast %123 : vector<8x128xf32> to vector<8x1x128xf32>
    %125 = vector.extract_strided_slice %3 {offsets = [4, 0, 0], sizes = [1, 8, 128], strides = [1, 1, 1]} : vector<8x8x128xf32> to vector<1x8x128xf32>
    %126 = vector.shape_cast %125 : vector<1x8x128xf32> to vector<8x128xf32>
    %127 = vector.shape_cast %126 : vector<8x128xf32> to vector<8x1x128xf32>
    %128 = vector.extract_strided_slice %5 {offsets = [4, 0, 0], sizes = [1, 8, 128], strides = [1, 1, 1]} : vector<8x8x128xf32> to vector<1x8x128xf32>
    %129 = vector.shape_cast %128 : vector<1x8x128xf32> to vector<8x128xf32>
    %130 = vector.shape_cast %129 : vector<8x128xf32> to vector<1x8x128xf32>
    %131 = vector.extract_strided_slice %7 {offsets = [4, 0, 0], sizes = [1, 8, 128], strides = [1, 1, 1]} : vector<8x8x128xf32> to vector<1x8x128xf32>
    %132 = vector.shape_cast %131 : vector<1x8x128xf32> to vector<8x128xf32>
    %133 = vector.shape_cast %132 : vector<8x128xf32> to vector<1x8x128xf32>
    %134 = vector.broadcast %124 : vector<8x1x128xf32> to vector<8x8x128xf32>
    %135 = vector.broadcast %130 : vector<1x8x128xf32> to vector<8x8x128xf32>
    %136 = arith.mulf %134, %135 : vector<8x8x128xf32>
    %137 = vector.broadcast %127 : vector<8x1x128xf32> to vector<8x8x128xf32>
    %138 = vector.broadcast %133 : vector<1x8x128xf32> to vector<8x8x128xf32>
    %139 = arith.mulf %137, %138 : vector<8x8x128xf32>
    %140 = arith.subf %136, %139 : vector<8x8x128xf32>
    %141 = arith.addf %113, %140 : vector<8x8x128xf32>
    %142 = vector.broadcast %124 : vector<8x1x128xf32> to vector<8x8x128xf32>
    %143 = vector.broadcast %133 : vector<1x8x128xf32> to vector<8x8x128xf32>
    %144 = arith.mulf %142, %143 : vector<8x8x128xf32>
    %145 = vector.broadcast %127 : vector<8x1x128xf32> to vector<8x8x128xf32>
    %146 = vector.broadcast %130 : vector<1x8x128xf32> to vector<8x8x128xf32>
    %147 = arith.mulf %145, %146 : vector<8x8x128xf32>
    %148 = arith.addf %144, %147 : vector<8x8x128xf32>
    %149 = arith.addf %121, %148 : vector<8x8x128xf32>
    %150 = vector.extract_strided_slice %1 {offsets = [5, 0, 0], sizes = [1, 8, 128], strides = [1, 1, 1]} : vector<8x8x128xf32> to vector<1x8x128xf32>
    %151 = vector.shape_cast %150 : vector<1x8x128xf32> to vector<8x128xf32>
    %152 = vector.shape_cast %151 : vector<8x128xf32> to vector<8x1x128xf32>
    %153 = vector.extract_strided_slice %3 {offsets = [5, 0, 0], sizes = [1, 8, 128], strides = [1, 1, 1]} : vector<8x8x128xf32> to vector<1x8x128xf32>
    %154 = vector.shape_cast %153 : vector<1x8x128xf32> to vector<8x128xf32>
    %155 = vector.shape_cast %154 : vector<8x128xf32> to vector<8x1x128xf32>
    %156 = vector.extract_strided_slice %5 {offsets = [5, 0, 0], sizes = [1, 8, 128], strides = [1, 1, 1]} : vector<8x8x128xf32> to vector<1x8x128xf32>
    %157 = vector.shape_cast %156 : vector<1x8x128xf32> to vector<8x128xf32>
    %158 = vector.shape_cast %157 : vector<8x128xf32> to vector<1x8x128xf32>
    %159 = vector.extract_strided_slice %7 {offsets = [5, 0, 0], sizes = [1, 8, 128], strides = [1, 1, 1]} : vector<8x8x128xf32> to vector<1x8x128xf32>
    %160 = vector.shape_cast %159 : vector<1x8x128xf32> to vector<8x128xf32>
    %161 = vector.shape_cast %160 : vector<8x128xf32> to vector<1x8x128xf32>
    %162 = vector.broadcast %152 : vector<8x1x128xf32> to vector<8x8x128xf32>
    %163 = vector.broadcast %158 : vector<1x8x128xf32> to vector<8x8x128xf32>
    %164 = arith.mulf %162, %163 : vector<8x8x128xf32>
    %165 = vector.broadcast %155 : vector<8x1x128xf32> to vector<8x8x128xf32>
    %166 = vector.broadcast %161 : vector<1x8x128xf32> to vector<8x8x128xf32>
    %167 = arith.mulf %165, %166 : vector<8x8x128xf32>
    %168 = arith.subf %164, %167 : vector<8x8x128xf32>
    %169 = arith.addf %141, %168 : vector<8x8x128xf32>
    %170 = vector.broadcast %152 : vector<8x1x128xf32> to vector<8x8x128xf32>
    %171 = vector.broadcast %161 : vector<1x8x128xf32> to vector<8x8x128xf32>
    %172 = arith.mulf %170, %171 : vector<8x8x128xf32>
    %173 = vector.broadcast %155 : vector<8x1x128xf32> to vector<8x8x128xf32>
    %174 = vector.broadcast %158 : vector<1x8x128xf32> to vector<8x8x128xf32>
    %175 = arith.mulf %173, %174 : vector<8x8x128xf32>
    %176 = arith.addf %172, %175 : vector<8x8x128xf32>
    %177 = arith.addf %149, %176 : vector<8x8x128xf32>
    %178 = vector.extract_strided_slice %1 {offsets = [6, 0, 0], sizes = [1, 8, 128], strides = [1, 1, 1]} : vector<8x8x128xf32> to vector<1x8x128xf32>
    %179 = vector.shape_cast %178 : vector<1x8x128xf32> to vector<8x128xf32>
    %180 = vector.shape_cast %179 : vector<8x128xf32> to vector<8x1x128xf32>
    %181 = vector.extract_strided_slice %3 {offsets = [6, 0, 0], sizes = [1, 8, 128], strides = [1, 1, 1]} : vector<8x8x128xf32> to vector<1x8x128xf32>
    %182 = vector.shape_cast %181 : vector<1x8x128xf32> to vector<8x128xf32>
    %183 = vector.shape_cast %182 : vector<8x128xf32> to vector<8x1x128xf32>
    %184 = vector.extract_strided_slice %5 {offsets = [6, 0, 0], sizes = [1, 8, 128], strides = [1, 1, 1]} : vector<8x8x128xf32> to vector<1x8x128xf32>
    %185 = vector.shape_cast %184 : vector<1x8x128xf32> to vector<8x128xf32>
    %186 = vector.shape_cast %185 : vector<8x128xf32> to vector<1x8x128xf32>
    %187 = vector.extract_strided_slice %7 {offsets = [6, 0, 0], sizes = [1, 8, 128], strides = [1, 1, 1]} : vector<8x8x128xf32> to vector<1x8x128xf32>
    %188 = vector.shape_cast %187 : vector<1x8x128xf32> to vector<8x128xf32>
    %189 = vector.shape_cast %188 : vector<8x128xf32> to vector<1x8x128xf32>
    %190 = vector.broadcast %180 : vector<8x1x128xf32> to vector<8x8x128xf32>
    %191 = vector.broadcast %186 : vector<1x8x128xf32> to vector<8x8x128xf32>
    %192 = arith.mulf %190, %191 : vector<8x8x128xf32>
    %193 = vector.broadcast %183 : vector<8x1x128xf32> to vector<8x8x128xf32>
    %194 = vector.broadcast %189 : vector<1x8x128xf32> to vector<8x8x128xf32>
    %195 = arith.mulf %193, %194 : vector<8x8x128xf32>
    %196 = arith.subf %192, %195 : vector<8x8x128xf32>
    %197 = arith.addf %169, %196 : vector<8x8x128xf32>
    %198 = vector.broadcast %180 : vector<8x1x128xf32> to vector<8x8x128xf32>
    %199 = vector.broadcast %189 : vector<1x8x128xf32> to vector<8x8x128xf32>
    %200 = arith.mulf %198, %199 : vector<8x8x128xf32>
    %201 = vector.broadcast %183 : vector<8x1x128xf32> to vector<8x8x128xf32>
    %202 = vector.broadcast %186 : vector<1x8x128xf32> to vector<8x8x128xf32>
    %203 = arith.mulf %201, %202 : vector<8x8x128xf32>
    %204 = arith.addf %200, %203 : vector<8x8x128xf32>
    %205 = arith.addf %177, %204 : vector<8x8x128xf32>
    %206 = vector.extract_strided_slice %1 {offsets = [7, 0, 0], sizes = [1, 8, 128], strides = [1, 1, 1]} : vector<8x8x128xf32> to vector<1x8x128xf32>
    %207 = vector.shape_cast %206 : vector<1x8x128xf32> to vector<8x128xf32>
    %208 = vector.shape_cast %207 : vector<8x128xf32> to vector<8x1x128xf32>
    %209 = vector.extract_strided_slice %3 {offsets = [7, 0, 0], sizes = [1, 8, 128], strides = [1, 1, 1]} : vector<8x8x128xf32> to vector<1x8x128xf32>
    %210 = vector.shape_cast %209 : vector<1x8x128xf32> to vector<8x128xf32>
    %211 = vector.shape_cast %210 : vector<8x128xf32> to vector<8x1x128xf32>
    %212 = vector.extract_strided_slice %5 {offsets = [7, 0, 0], sizes = [1, 8, 128], strides = [1, 1, 1]} : vector<8x8x128xf32> to vector<1x8x128xf32>
    %213 = vector.shape_cast %212 : vector<1x8x128xf32> to vector<8x128xf32>
    %214 = vector.shape_cast %213 : vector<8x128xf32> to vector<1x8x128xf32>
    %215 = vector.extract_strided_slice %7 {offsets = [7, 0, 0], sizes = [1, 8, 128], strides = [1, 1, 1]} : vector<8x8x128xf32> to vector<1x8x128xf32>
    %216 = vector.shape_cast %215 : vector<1x8x128xf32> to vector<8x128xf32>
    %217 = vector.shape_cast %216 : vector<8x128xf32> to vector<1x8x128xf32>
    %218 = vector.broadcast %208 : vector<8x1x128xf32> to vector<8x8x128xf32>
    %219 = vector.broadcast %214 : vector<1x8x128xf32> to vector<8x8x128xf32>
    %220 = arith.mulf %218, %219 : vector<8x8x128xf32>
    %221 = vector.broadcast %211 : vector<8x1x128xf32> to vector<8x8x128xf32>
    %222 = vector.broadcast %217 : vector<1x8x128xf32> to vector<8x8x128xf32>
    %223 = arith.mulf %221, %222 : vector<8x8x128xf32>
    %224 = arith.subf %220, %223 : vector<8x8x128xf32>
    %225 = arith.addf %197, %224 : vector<8x8x128xf32>
    %226 = vector.broadcast %208 : vector<8x1x128xf32> to vector<8x8x128xf32>
    %227 = vector.broadcast %217 : vector<1x8x128xf32> to vector<8x8x128xf32>
    %228 = arith.mulf %226, %227 : vector<8x8x128xf32>
    %229 = vector.broadcast %211 : vector<8x1x128xf32> to vector<8x8x128xf32>
    %230 = vector.broadcast %214 : vector<1x8x128xf32> to vector<8x8x128xf32>
    %231 = arith.mulf %229, %230 : vector<8x8x128xf32>
    %232 = arith.addf %228, %231 : vector<8x8x128xf32>
    %233 = arith.addf %205, %232 : vector<8x8x128xf32>
    %234 = math.tanh %225 : vector<8x8x128xf32>
    %235 = math.tanh %233 : vector<8x8x128xf32>
    %236 = vector.extract_strided_slice %5 {offsets = [0, 0, 0], sizes = [1, 8, 128], strides = [1, 1, 1]} : vector<8x8x128xf32> to vector<1x8x128xf32>
    %237 = vector.shape_cast %236 : vector<1x8x128xf32> to vector<8x128xf32>
    %238 = vector.shape_cast %237 : vector<8x128xf32> to vector<1x8x128xf32>
    %239 = vector.extract_strided_slice %7 {offsets = [0, 0, 0], sizes = [1, 8, 128], strides = [1, 1, 1]} : vector<8x8x128xf32> to vector<1x8x128xf32>
    %240 = vector.shape_cast %239 : vector<1x8x128xf32> to vector<8x128xf32>
    %241 = vector.shape_cast %240 : vector<8x128xf32> to vector<1x8x128xf32>
    %242 = vector.broadcast %238 : vector<1x8x128xf32> to vector<8x8x128xf32>
    %243 = arith.mulf %234, %242 : vector<8x8x128xf32>
    %244 = vector.broadcast %241 : vector<1x8x128xf32> to vector<8x8x128xf32>
    %245 = arith.mulf %235, %244 : vector<8x8x128xf32>
    %246 = arith.subf %243, %245 : vector<8x8x128xf32>
    %cst_15 = arith.constant dense<0.000000e+00> : vector<8x128xf32>
    %247 = vector.multi_reduction <add>, %246, %cst_15 [1] : vector<8x8x128xf32> to vector<8x128xf32>
    %248 = vector.broadcast %241 : vector<1x8x128xf32> to vector<8x8x128xf32>
    %249 = arith.mulf %234, %248 : vector<8x8x128xf32>
    %250 = vector.broadcast %238 : vector<1x8x128xf32> to vector<8x8x128xf32>
    %251 = arith.mulf %235, %250 : vector<8x8x128xf32>
    %252 = arith.addf %249, %251 : vector<8x8x128xf32>
    %cst_16 = arith.constant dense<0.000000e+00> : vector<8x128xf32>
    %253 = vector.multi_reduction <add>, %252, %cst_16 [1] : vector<8x8x128xf32> to vector<8x128xf32>
    %254 = vector.extract_strided_slice %5 {offsets = [1, 0, 0], sizes = [1, 8, 128], strides = [1, 1, 1]} : vector<8x8x128xf32> to vector<1x8x128xf32>
    %255 = vector.shape_cast %254 : vector<1x8x128xf32> to vector<8x128xf32>
    %256 = vector.shape_cast %255 : vector<8x128xf32> to vector<1x8x128xf32>
    %257 = vector.extract_strided_slice %7 {offsets = [1, 0, 0], sizes = [1, 8, 128], strides = [1, 1, 1]} : vector<8x8x128xf32> to vector<1x8x128xf32>
    %258 = vector.shape_cast %257 : vector<1x8x128xf32> to vector<8x128xf32>
    %259 = vector.shape_cast %258 : vector<8x128xf32> to vector<1x8x128xf32>
    %260 = vector.broadcast %256 : vector<1x8x128xf32> to vector<8x8x128xf32>
    %261 = arith.mulf %234, %260 : vector<8x8x128xf32>
    %262 = vector.broadcast %259 : vector<1x8x128xf32> to vector<8x8x128xf32>
    %263 = arith.mulf %235, %262 : vector<8x8x128xf32>
    %264 = arith.subf %261, %263 : vector<8x8x128xf32>
    %cst_17 = arith.constant dense<0.000000e+00> : vector<8x128xf32>
    %265 = vector.multi_reduction <add>, %264, %cst_17 [1] : vector<8x8x128xf32> to vector<8x128xf32>
    %266 = vector.broadcast %259 : vector<1x8x128xf32> to vector<8x8x128xf32>
    %267 = arith.mulf %234, %266 : vector<8x8x128xf32>
    %268 = vector.broadcast %256 : vector<1x8x128xf32> to vector<8x8x128xf32>
    %269 = arith.mulf %235, %268 : vector<8x8x128xf32>
    %270 = arith.addf %267, %269 : vector<8x8x128xf32>
    %cst_18 = arith.constant dense<0.000000e+00> : vector<8x128xf32>
    %271 = vector.multi_reduction <add>, %270, %cst_18 [1] : vector<8x8x128xf32> to vector<8x128xf32>
    %272 = vector.extract_strided_slice %5 {offsets = [2, 0, 0], sizes = [1, 8, 128], strides = [1, 1, 1]} : vector<8x8x128xf32> to vector<1x8x128xf32>
    %273 = vector.shape_cast %272 : vector<1x8x128xf32> to vector<8x128xf32>
    %274 = vector.shape_cast %273 : vector<8x128xf32> to vector<1x8x128xf32>
    %275 = vector.extract_strided_slice %7 {offsets = [2, 0, 0], sizes = [1, 8, 128], strides = [1, 1, 1]} : vector<8x8x128xf32> to vector<1x8x128xf32>
    %276 = vector.shape_cast %275 : vector<1x8x128xf32> to vector<8x128xf32>
    %277 = vector.shape_cast %276 : vector<8x128xf32> to vector<1x8x128xf32>
    %278 = vector.broadcast %274 : vector<1x8x128xf32> to vector<8x8x128xf32>
    %279 = arith.mulf %234, %278 : vector<8x8x128xf32>
    %280 = vector.broadcast %277 : vector<1x8x128xf32> to vector<8x8x128xf32>
    %281 = arith.mulf %235, %280 : vector<8x8x128xf32>
    %282 = arith.subf %279, %281 : vector<8x8x128xf32>
    %cst_19 = arith.constant dense<0.000000e+00> : vector<8x128xf32>
    %283 = vector.multi_reduction <add>, %282, %cst_19 [1] : vector<8x8x128xf32> to vector<8x128xf32>
    %284 = vector.broadcast %277 : vector<1x8x128xf32> to vector<8x8x128xf32>
    %285 = arith.mulf %234, %284 : vector<8x8x128xf32>
    %286 = vector.broadcast %274 : vector<1x8x128xf32> to vector<8x8x128xf32>
    %287 = arith.mulf %235, %286 : vector<8x8x128xf32>
    %288 = arith.addf %285, %287 : vector<8x8x128xf32>
    %cst_20 = arith.constant dense<0.000000e+00> : vector<8x128xf32>
    %289 = vector.multi_reduction <add>, %288, %cst_20 [1] : vector<8x8x128xf32> to vector<8x128xf32>
    %290 = vector.extract_strided_slice %5 {offsets = [3, 0, 0], sizes = [1, 8, 128], strides = [1, 1, 1]} : vector<8x8x128xf32> to vector<1x8x128xf32>
    %291 = vector.shape_cast %290 : vector<1x8x128xf32> to vector<8x128xf32>
    %292 = vector.shape_cast %291 : vector<8x128xf32> to vector<1x8x128xf32>
    %293 = vector.extract_strided_slice %7 {offsets = [3, 0, 0], sizes = [1, 8, 128], strides = [1, 1, 1]} : vector<8x8x128xf32> to vector<1x8x128xf32>
    %294 = vector.shape_cast %293 : vector<1x8x128xf32> to vector<8x128xf32>
    %295 = vector.shape_cast %294 : vector<8x128xf32> to vector<1x8x128xf32>
    %296 = vector.broadcast %292 : vector<1x8x128xf32> to vector<8x8x128xf32>
    %297 = arith.mulf %234, %296 : vector<8x8x128xf32>
    %298 = vector.broadcast %295 : vector<1x8x128xf32> to vector<8x8x128xf32>
    %299 = arith.mulf %235, %298 : vector<8x8x128xf32>
    %300 = arith.subf %297, %299 : vector<8x8x128xf32>
    %cst_21 = arith.constant dense<0.000000e+00> : vector<8x128xf32>
    %301 = vector.multi_reduction <add>, %300, %cst_21 [1] : vector<8x8x128xf32> to vector<8x128xf32>
    %302 = vector.broadcast %295 : vector<1x8x128xf32> to vector<8x8x128xf32>
    %303 = arith.mulf %234, %302 : vector<8x8x128xf32>
    %304 = vector.broadcast %292 : vector<1x8x128xf32> to vector<8x8x128xf32>
    %305 = arith.mulf %235, %304 : vector<8x8x128xf32>
    %306 = arith.addf %303, %305 : vector<8x8x128xf32>
    %cst_22 = arith.constant dense<0.000000e+00> : vector<8x128xf32>
    %307 = vector.multi_reduction <add>, %306, %cst_22 [1] : vector<8x8x128xf32> to vector<8x128xf32>
    %308 = vector.extract_strided_slice %5 {offsets = [4, 0, 0], sizes = [1, 8, 128], strides = [1, 1, 1]} : vector<8x8x128xf32> to vector<1x8x128xf32>
    %309 = vector.shape_cast %308 : vector<1x8x128xf32> to vector<8x128xf32>
    %310 = vector.shape_cast %309 : vector<8x128xf32> to vector<1x8x128xf32>
    %311 = vector.extract_strided_slice %7 {offsets = [4, 0, 0], sizes = [1, 8, 128], strides = [1, 1, 1]} : vector<8x8x128xf32> to vector<1x8x128xf32>
    %312 = vector.shape_cast %311 : vector<1x8x128xf32> to vector<8x128xf32>
    %313 = vector.shape_cast %312 : vector<8x128xf32> to vector<1x8x128xf32>
    %314 = vector.broadcast %310 : vector<1x8x128xf32> to vector<8x8x128xf32>
    %315 = arith.mulf %234, %314 : vector<8x8x128xf32>
    %316 = vector.broadcast %313 : vector<1x8x128xf32> to vector<8x8x128xf32>
    %317 = arith.mulf %235, %316 : vector<8x8x128xf32>
    %318 = arith.subf %315, %317 : vector<8x8x128xf32>
    %cst_23 = arith.constant dense<0.000000e+00> : vector<8x128xf32>
    %319 = vector.multi_reduction <add>, %318, %cst_23 [1] : vector<8x8x128xf32> to vector<8x128xf32>
    %320 = vector.broadcast %313 : vector<1x8x128xf32> to vector<8x8x128xf32>
    %321 = arith.mulf %234, %320 : vector<8x8x128xf32>
    %322 = vector.broadcast %310 : vector<1x8x128xf32> to vector<8x8x128xf32>
    %323 = arith.mulf %235, %322 : vector<8x8x128xf32>
    %324 = arith.addf %321, %323 : vector<8x8x128xf32>
    %cst_24 = arith.constant dense<0.000000e+00> : vector<8x128xf32>
    %325 = vector.multi_reduction <add>, %324, %cst_24 [1] : vector<8x8x128xf32> to vector<8x128xf32>
    %326 = vector.extract_strided_slice %5 {offsets = [5, 0, 0], sizes = [1, 8, 128], strides = [1, 1, 1]} : vector<8x8x128xf32> to vector<1x8x128xf32>
    %327 = vector.shape_cast %326 : vector<1x8x128xf32> to vector<8x128xf32>
    %328 = vector.shape_cast %327 : vector<8x128xf32> to vector<1x8x128xf32>
    %329 = vector.extract_strided_slice %7 {offsets = [5, 0, 0], sizes = [1, 8, 128], strides = [1, 1, 1]} : vector<8x8x128xf32> to vector<1x8x128xf32>
    %330 = vector.shape_cast %329 : vector<1x8x128xf32> to vector<8x128xf32>
    %331 = vector.shape_cast %330 : vector<8x128xf32> to vector<1x8x128xf32>
    %332 = vector.broadcast %328 : vector<1x8x128xf32> to vector<8x8x128xf32>
    %333 = arith.mulf %234, %332 : vector<8x8x128xf32>
    %334 = vector.broadcast %331 : vector<1x8x128xf32> to vector<8x8x128xf32>
    %335 = arith.mulf %235, %334 : vector<8x8x128xf32>
    %336 = arith.subf %333, %335 : vector<8x8x128xf32>
    %cst_25 = arith.constant dense<0.000000e+00> : vector<8x128xf32>
    %337 = vector.multi_reduction <add>, %336, %cst_25 [1] : vector<8x8x128xf32> to vector<8x128xf32>
    %338 = vector.broadcast %331 : vector<1x8x128xf32> to vector<8x8x128xf32>
    %339 = arith.mulf %234, %338 : vector<8x8x128xf32>
    %340 = vector.broadcast %328 : vector<1x8x128xf32> to vector<8x8x128xf32>
    %341 = arith.mulf %235, %340 : vector<8x8x128xf32>
    %342 = arith.addf %339, %341 : vector<8x8x128xf32>
    %cst_26 = arith.constant dense<0.000000e+00> : vector<8x128xf32>
    %343 = vector.multi_reduction <add>, %342, %cst_26 [1] : vector<8x8x128xf32> to vector<8x128xf32>
    %344 = vector.extract_strided_slice %5 {offsets = [6, 0, 0], sizes = [1, 8, 128], strides = [1, 1, 1]} : vector<8x8x128xf32> to vector<1x8x128xf32>
    %345 = vector.shape_cast %344 : vector<1x8x128xf32> to vector<8x128xf32>
    %346 = vector.shape_cast %345 : vector<8x128xf32> to vector<1x8x128xf32>
    %347 = vector.extract_strided_slice %7 {offsets = [6, 0, 0], sizes = [1, 8, 128], strides = [1, 1, 1]} : vector<8x8x128xf32> to vector<1x8x128xf32>
    %348 = vector.shape_cast %347 : vector<1x8x128xf32> to vector<8x128xf32>
    %349 = vector.shape_cast %348 : vector<8x128xf32> to vector<1x8x128xf32>
    %350 = vector.broadcast %346 : vector<1x8x128xf32> to vector<8x8x128xf32>
    %351 = arith.mulf %234, %350 : vector<8x8x128xf32>
    %352 = vector.broadcast %349 : vector<1x8x128xf32> to vector<8x8x128xf32>
    %353 = arith.mulf %235, %352 : vector<8x8x128xf32>
    %354 = arith.subf %351, %353 : vector<8x8x128xf32>
    %cst_27 = arith.constant dense<0.000000e+00> : vector<8x128xf32>
    %355 = vector.multi_reduction <add>, %354, %cst_27 [1] : vector<8x8x128xf32> to vector<8x128xf32>
    %356 = vector.broadcast %349 : vector<1x8x128xf32> to vector<8x8x128xf32>
    %357 = arith.mulf %234, %356 : vector<8x8x128xf32>
    %358 = vector.broadcast %346 : vector<1x8x128xf32> to vector<8x8x128xf32>
    %359 = arith.mulf %235, %358 : vector<8x8x128xf32>
    %360 = arith.addf %357, %359 : vector<8x8x128xf32>
    %cst_28 = arith.constant dense<0.000000e+00> : vector<8x128xf32>
    %361 = vector.multi_reduction <add>, %360, %cst_28 [1] : vector<8x8x128xf32> to vector<8x128xf32>
    %362 = vector.extract_strided_slice %5 {offsets = [7, 0, 0], sizes = [1, 8, 128], strides = [1, 1, 1]} : vector<8x8x128xf32> to vector<1x8x128xf32>
    %363 = vector.shape_cast %362 : vector<1x8x128xf32> to vector<8x128xf32>
    %364 = vector.shape_cast %363 : vector<8x128xf32> to vector<1x8x128xf32>
    %365 = vector.extract_strided_slice %7 {offsets = [7, 0, 0], sizes = [1, 8, 128], strides = [1, 1, 1]} : vector<8x8x128xf32> to vector<1x8x128xf32>
    %366 = vector.shape_cast %365 : vector<1x8x128xf32> to vector<8x128xf32>
    %367 = vector.shape_cast %366 : vector<8x128xf32> to vector<1x8x128xf32>
    %368 = vector.broadcast %364 : vector<1x8x128xf32> to vector<8x8x128xf32>
    %369 = arith.mulf %234, %368 : vector<8x8x128xf32>
    %370 = vector.broadcast %367 : vector<1x8x128xf32> to vector<8x8x128xf32>
    %371 = arith.mulf %235, %370 : vector<8x8x128xf32>
    %372 = arith.subf %369, %371 : vector<8x8x128xf32>
    %cst_29 = arith.constant dense<0.000000e+00> : vector<8x128xf32>
    %373 = vector.multi_reduction <add>, %372, %cst_29 [1] : vector<8x8x128xf32> to vector<8x128xf32>
    %374 = vector.broadcast %367 : vector<1x8x128xf32> to vector<8x8x128xf32>
    %375 = arith.mulf %234, %374 : vector<8x8x128xf32>
    %376 = vector.broadcast %364 : vector<1x8x128xf32> to vector<8x8x128xf32>
    %377 = arith.mulf %235, %376 : vector<8x8x128xf32>
    %378 = arith.addf %375, %377 : vector<8x8x128xf32>
    %cst_30 = arith.constant dense<0.000000e+00> : vector<8x128xf32>
    %379 = vector.multi_reduction <add>, %378, %cst_30 [1] : vector<8x8x128xf32> to vector<8x128xf32>
    %380 = vector.shape_cast %247 : vector<8x128xf32> to vector<1x8x128xf32>
    %381 = vector.shape_cast %265 : vector<8x128xf32> to vector<1x8x128xf32>
    %382 = vector.shape_cast %283 : vector<8x128xf32> to vector<1x8x128xf32>
    %383 = vector.shape_cast %301 : vector<8x128xf32> to vector<1x8x128xf32>
    %384 = vector.shape_cast %319 : vector<8x128xf32> to vector<1x8x128xf32>
    %385 = vector.shape_cast %337 : vector<8x128xf32> to vector<1x8x128xf32>
    %386 = vector.shape_cast %355 : vector<8x128xf32> to vector<1x8x128xf32>
    %387 = vector.shape_cast %373 : vector<8x128xf32> to vector<1x8x128xf32>
    %388 = tpu.concatenate %380, %381, %382, %383, %384, %385, %386, %387 in 0 : vector<1x8x128xf32>, vector<1x8x128xf32>, vector<1x8x128xf32>, vector<1x8x128xf32>, vector<1x8x128xf32>, vector<1x8x128xf32>, vector<1x8x128xf32>, vector<1x8x128xf32> -> vector<8x8x128xf32>
    %cst_31 = arith.constant 1.562500e-02 : f32
    %389 = vector.broadcast %cst_31 : f32 to vector<8x8x128xf32>
    %390 = arith.mulf %388, %389 : vector<8x8x128xf32>
    %391 = vector.shape_cast %253 : vector<8x128xf32> to vector<1x8x128xf32>
    %392 = vector.shape_cast %271 : vector<8x128xf32> to vector<1x8x128xf32>
    %393 = vector.shape_cast %289 : vector<8x128xf32> to vector<1x8x128xf32>
    %394 = vector.shape_cast %307 : vector<8x128xf32> to vector<1x8x128xf32>
    %395 = vector.shape_cast %325 : vector<8x128xf32> to vector<1x8x128xf32>
    %396 = vector.shape_cast %343 : vector<8x128xf32> to vector<1x8x128xf32>
    %397 = vector.shape_cast %361 : vector<8x128xf32> to vector<1x8x128xf32>
    %398 = vector.shape_cast %379 : vector<8x128xf32> to vector<1x8x128xf32>
    %399 = tpu.concatenate %391, %392, %393, %394, %395, %396, %397, %398 in 0 : vector<1x8x128xf32>, vector<1x8x128xf32>, vector<1x8x128xf32>, vector<1x8x128xf32>, vector<1x8x128xf32>, vector<1x8x128xf32>, vector<1x8x128xf32>, vector<1x8x128xf32> -> vector<8x8x128xf32>
    %cst_32 = arith.constant 1.562500e-02 : f32
    %400 = vector.broadcast %cst_32 : f32 to vector<8x8x128xf32>
    %401 = arith.mulf %399, %400 : vector<8x8x128xf32>
    %402 = vector.shape_cast %390 : vector<8x8x128xf32> to vector<1x8x8x128xf32>
    %403 = vector.shape_cast %401 : vector<8x8x128xf32> to vector<1x8x8x128xf32>
    %404 = tpu.concatenate %402, %403 in 0 : vector<1x8x8x128xf32>, vector<1x8x8x128xf32> -> vector<2x8x8x128xf32>
    %cst_33 = arith.constant 0.000000e+00 : f32
    %405 = vector.broadcast %cst_33 : f32 to vector<2x8x1x128xf32>
    %406 = tpu.concatenate %404, %405 in 2 : vector<2x8x8x128xf32>, vector<2x8x1x128xf32> -> vector<2x8x9x128xf32>
    %c0_34 = arith.constant 0 : index
    %c0_35 = arith.constant 0 : index
    %c0_36 = arith.constant 0 : index
    %c0_37 = arith.constant 0 : index
    %407 = vector.load %arg3[%c0_34, %c0_35, %c0_36, %c0_37] : memref<2x8x9x128xf32, #tpu.memory_space<vmem>>, vector<2x8x9x128xf32>
    tpu.vector_store %arg3[%c0_34, %c0_35, %c0_36, %c0_37], %406 {strides = array<i32>} : memref<2x8x9x128xf32, #tpu.memory_space<vmem>>, vector<2x8x9x128xf32>,
    return
  }
  func.func @transform_0(%arg0: i32) -> (i32, i32, i32, i32) {
    %c0_i32 = arith.constant 0 : i32
    %c0_i32_0 = arith.constant 0 : i32
    %c0_i32_1 = arith.constant 0 : i32
    %c0_i32_2 = arith.constant 0 : i32
    return %c0_i32, %c0_i32_0, %c0_i32_1, %arg0 : i32, i32, i32, i32
  }
  func.func @transform_1(%arg0: i32) -> (i32, i32, i32, i32) {
    %c0_i32 = arith.constant 0 : i32
    %c0_i32_0 = arith.constant 0 : i32
    %c0_i32_1 = arith.constant 0 : i32
    %c0_i32_2 = arith.constant 0 : i32
    return %c0_i32, %c0_i32_0, %c0_i32_1, %arg0 : i32, i32, i32, i32
  }
  func.func @transform_2(%arg0: i32) -> (i32, i32, i32, i32) {
    %c0_i32 = arith.constant 0 : i32
    %c0_i32_0 = arith.constant 0 : i32
    %c0_i32_1 = arith.constant 0 : i32
    %c0_i32_2 = arith.constant 0 : i32
    return %c0_i32, %c0_i32_0, %c0_i32_1, %arg0 : i32, i32, i32, i32
  }
}

</mosaic_0001>

<llo_original>
// kernel: tpu_custom_call.1
$region0: #{tpu_custom_call.1}
  #allocation0 [shape = 'u32[]', space=smem, size = 0x4, offset = 0x4, fixed_abs, tag = 'smem constant byte address 0x4 - core index']
  #allocation1 [shape = 'u32[72,128]{1,0:T(1,128)}', space=vmem, size = 0x9000, scoped, tag = 'internal scratch']
  %s0 = inlined_call_operand.hbm [shape: f32[2,8,8,128], index: 0, kind: input, shape index: {}]
  %s1 = inlined_call_operand.hbm [shape: f32[2,8,8,128], index: 1, kind: input, shape index: {}]
  %s2 = inlined_call_operand.vmem [shape: f32[2,8,9,128], index: 2, kind: output, shape index: {}]
  %s3 = sld [smem:[#allocation0]]
  $region26: #{tpu_custom_call.1} parent=0
    _
  %s5 = ssub.s32 1, %s3
  %s6 = scalar_select 0, %s5, %s3
  $region1: #{tpu_custom_call.1} parent=0
    #allocation2 [shape = 'u8[65536]{0}', space=vmem, size = 0x10000, scoped, tag = 'input window, operand 0, single buffered']
    #allocation3 [shape = 's32[1]{0}', space=sflag, size = 0x4, scoped, tag = 'scoped memory for tpu_custom_call.1']
    #allocation4 [shape = 'u8[65536]{0}', space=vmem, size = 0x10000, scoped, tag = 'input window, operand 1, single buffered']
    #allocation5 [shape = 's32[1]{0}', space=sflag, size = 0x4, scoped, tag = 'scoped memory for tpu_custom_call.1']
    %7 = vsyncpa [#allocation3], 0
    %8 = vsyncpa [#allocation5], 0
    // Predicated region
    $region2: #{tpu_custom_call.1} parent=1 // pred_check
      _
    $region3: #{tpu_custom_call.1} parent=1 // pred_check_branch
      %10 = sbr.rel (0) target = $region5
    $region4: #{tpu_custom_call.1} parent=1 // pred_region
      %12 = vsyncadd [#allocation3], 0
      %s13 = sshll.u32 %s0, 4
      %s14 = int_to_ptr.hbm [resolvable:$true] %s13
      %s15 = sshll.u32 [#allocation2], 4
      %s16 = int_to_ptr.vmem [resolvable:$true] %s15
      %21 = dma.hbm_to_vmem [thread:$0]  %s14, 2048, %s16, [#allocation3], 128, 128, 8
    $region5: #{tpu_custom_call.1} parent=1 // pred_fallthru
      _
    // Predicated region
    $region6: #{tpu_custom_call.1} parent=1 // pred_check
      _
    $region7: #{tpu_custom_call.1} parent=1 // pred_check_branch
      %23 = sbr.rel (0) target = $region9
    $region8: #{tpu_custom_call.1} parent=1 // pred_region
      %25 = vsyncadd [#allocation5], 0
      %s26 = sshll.u32 %s1, 4
      %s27 = int_to_ptr.hbm [resolvable:$true] %s26
      %s28 = sshll.u32 [#allocation4], 4
      %s29 = int_to_ptr.vmem [resolvable:$true] %s28
      %34 = dma.hbm_to_vmem [thread:$0]  %s27, 2048, %s29, [#allocation5], 128, 128, 8
    $region9: #{tpu_custom_call.1} parent=1 // pred_fallthru
      _
    // Predicated region
    $region10: #{tpu_custom_call.1} parent=1 // pred_check
      _
    $region11: #{tpu_custom_call.1} parent=1 // pred_check_branch
      %36 = sbr.rel (0) target = $region13
    $region12: #{tpu_custom_call.1} parent=1 // pred_region
      %38 = dma.done [#allocation3], 2048
    $region13: #{tpu_custom_call.1} parent=1 // pred_fallthru
      _
    // Predicated region
    $region14: #{tpu_custom_call.1} parent=1 // pred_check
      _
    $region15: #{tpu_custom_call.1} parent=1 // pred_check_branch
      %40 = sbr.rel (0) target = $region17
    $region16: #{tpu_custom_call.1} parent=1 // pred_region
      %42 = dma.done [#allocation5], 2048
    $region17: #{tpu_custom_call.1} parent=1 // pred_fallthru
      _
    %v43 = vld [vmem:[#allocation2] sm:$0xff]
    %v44 = vld [vmem:[#allocation2 + $0x8] sm:$0xff]
    %v45 = vld [vmem:[#allocation2 + $0x10] sm:$0xff]
    %v46 = vld [vmem:[#allocation2 + $0x18] sm:$0xff]
    %v47 = vld [vmem:[#allocation2 + $0x20] sm:$0xff]
    %v48 = vld [vmem:[#allocation2 + $0x28] sm:$0xff]
    %v49 = vld [vmem:[#allocation2 + $0x30] sm:$0xff]
    %v50 = vld [vmem:[#allocation2 + $0x38] sm:$0xff]
    %s51 = scalar_lea.vmem [#allocation2], 64
    %v52 = vld [vmem:[%s51] sm:$0xff]
    %v53 = vld [vmem:[%s51 + $0x8] sm:$0xff]
    %v54 = vld [vmem:[%s51 + $0x10] sm:$0xff]
    %v55 = vld [vmem:[%s51 + $0x18] sm:$0xff]
    %v56 = vld [vmem:[%s51 + $0x20] sm:$0xff]
    %v57 = vld [vmem:[%s51 + $0x28] sm:$0xff]
    %v58 = vld [vmem:[%s51 + $0x30] sm:$0xff]
    %v59 = vld [vmem:[%s51 + $0x38] sm:$0xff]
    %v60 = vld [vmem:[#allocation4] sm:$0xff]
    %v61 = vld [vmem:[#allocation4 + $0x8] sm:$0xff]
    %v62 = vld [vmem:[#allocation4 + $0x10] sm:$0xff]
    %v63 = vld [vmem:[#allocation4 + $0x18] sm:$0xff]
    %v64 = vld [vmem:[#allocation4 + $0x20] sm:$0xff]
    %v65 = vld [vmem:[#allocation4 + $0x28] sm:$0xff]
    %v66 = vld [vmem:[#allocation4 + $0x30] sm:$0xff]
    %v67 = vld [vmem:[#allocation4 + $0x38] sm:$0xff]
    %s68 = scalar_lea.vmem [#allocation4], 64
    %v69 = vld [vmem:[%s68] sm:$0xff]
    %v70 = vld [vmem:[%s68 + $0x8] sm:$0xff]
    %v71 = vld [vmem:[%s68 + $0x10] sm:$0xff]
    %v72 = vld [vmem:[%s68 + $0x18] sm:$0xff]
    %v73 = vld [vmem:[%s68 + $0x20] sm:$0xff]
    %v74 = vld [vmem:[%s68 + $0x28] sm:$0xff]
    %v75 = vld [vmem:[%s68 + $0x30] sm:$0xff]
    %v76 = vld [vmem:[%s68 + $0x38] sm:$0xff]
    %v78 = vrot.slane %v43, 1
    %v79 = vrot.slane %v43, 2
    %v80 = vrot.slane %v43, 3
    %v81 = vrot.slane %v43, 4
    %v82 = vrot.slane %v43, 5
    %v83 = vrot.slane %v43, 6
    %v84 = vrot.slane %v43, 7
    %v86 = vrot.slane %v52, 1
    %v87 = vrot.slane %v52, 2
    %v88 = vrot.slane %v52, 3
    %v89 = vrot.slane %v52, 4
    %v90 = vrot.slane %v52, 5
    %v91 = vrot.slane %v52, 6
    %v92 = vrot.slane %v52, 7
    %v93 = vperm.slane %v43, 0
    %v94 = vperm.slane %v78, 0
    %v95 = vperm.slane %v79, 0
    %v96 = vperm.slane %v80, 0
    %v97 = vperm.slane %v81, 0
    %v98 = vperm.slane %v82, 0
    %v99 = vperm.slane %v83, 0
    %v100 = vperm.slane %v84, 0
    %v109 = vmul.f32 %v93, %v60
    %v110 = vmul.f32 %v94, %v60
    %v111 = vmul.f32 %v95, %v60
    %v112 = vmul.f32 %v96, %v60
    %v113 = vmul.f32 %v97, %v60
    %v114 = vmul.f32 %v98, %v60
    %v115 = vmul.f32 %v99, %v60
    %v116 = vmul.f32 %v100, %v60
    %v117 = vperm.slane %v52, 0
    %v118 = vperm.slane %v86, 0
    %v119 = vperm.slane %v87, 0
    %v120 = vperm.slane %v88, 0
    %v121 = vperm.slane %v89, 0
    %v122 = vperm.slane %v90, 0
    %v123 = vperm.slane %v91, 0
    %v124 = vperm.slane %v92, 0
    %v133 = vmul.f32 %v117, %v69
    %v134 = vmul.f32 %v118, %v69
    %v135 = vmul.f32 %v119, %v69
    %v136 = vmul.f32 %v120, %v69
    %v137 = vmul.f32 %v121, %v69
    %v138 = vmul.f32 %v122, %v69
    %v139 = vmul.f32 %v123, %v69
    %v140 = vmul.f32 %v124, %v69
    %v141 = vsub.f32 %v109, %v133
    %v142 = vsub.f32 %v110, %v134
    %v143 = vsub.f32 %v111, %v135
    %v144 = vsub.f32 %v112, %v136
    %v145 = vsub.f32 %v113, %v137
    %v146 = vsub.f32 %v114, %v138
    %v147 = vsub.f32 %v115, %v139
    %v148 = vsub.f32 %v116, %v140
    %v149 = vadd.f32 %v141, 0.0
    %v150 = vadd.f32 %v142, 0.0
    %v151 = vadd.f32 %v143, 0.0
    %v152 = vadd.f32 %v144, 0.0
    %v153 = vadd.f32 %v145, 0.0
    %v154 = vadd.f32 %v146, 0.0
    %v155 = vadd.f32 %v147, 0.0
    %v156 = vadd.f32 %v148, 0.0
    %v157 = vmul.f32 %v93, %v69
    %v158 = vmul.f32 %v94, %v69
    %v159 = vmul.f32 %v95, %v69
    %v160 = vmul.f32 %v96, %v69
    %v161 = vmul.f32 %v97, %v69
    %v162 = vmul.f32 %v98, %v69
    %v163 = vmul.f32 %v99, %v69
    %v164 = vmul.f32 %v100, %v69
    %v165 = vmul.f32 %v117, %v60
    %v166 = vmul.f32 %v118, %v60
    %v167 = vmul.f32 %v119, %v60
    %v168 = vmul.f32 %v120, %v60
    %v169 = vmul.f32 %v121, %v60
    %v170 = vmul.f32 %v122, %v60
    %v171 = vmul.f32 %v123, %v60
    %v172 = vmul.f32 %v124, %v60
    %v173 = vadd.f32 %v157, %v165
    %v174 = vadd.f32 %v158, %v166
    %v175 = vadd.f32 %v159, %v167
    %v176 = vadd.f32 %v160, %v168
    %v177 = vadd.f32 %v161, %v169
    %v178 = vadd.f32 %v162, %v170
    %v179 = vadd.f32 %v163, %v171
    %v180 = vadd.f32 %v164, %v172
    %v181 = vadd.f32 %v173, 0.0
    %v182 = vadd.f32 %v174, 0.0
    %v183 = vadd.f32 %v175, 0.0
    %v184 = vadd.f32 %v176, 0.0
    %v185 = vadd.f32 %v177, 0.0
    %v186 = vadd.f32 %v178, 0.0
    %v187 = vadd.f32 %v179, 0.0
    %v188 = vadd.f32 %v180, 0.0
    %v190 = vrot.slane %v44, 1
    %v191 = vrot.slane %v44, 2
    %v192 = vrot.slane %v44, 3
    %v193 = vrot.slane %v44, 4
    %v194 = vrot.slane %v44, 5
    %v195 = vrot.slane %v44, 6
    %v196 = vrot.slane %v44, 7
    %v198 = vrot.slane %v53, 1
    %v199 = vrot.slane %v53, 2
    %v200 = vrot.slane %v53, 3
    %v201 = vrot.slane %v53, 4
    %v202 = vrot.slane %v53, 5
    %v203 = vrot.slane %v53, 6
    %v204 = vrot.slane %v53, 7
    %v205 = vperm.slane %v44, 0
    %v206 = vperm.slane %v190, 0
    %v207 = vperm.slane %v191, 0
    %v208 = vperm.slane %v192, 0
    %v209 = vperm.slane %v193, 0
    %v210 = vperm.slane %v194, 0
    %v211 = vperm.slane %v195, 0
    %v212 = vperm.slane %v196, 0
    %v221 = vmul.f32 %v205, %v61
    %v222 = vmul.f32 %v206, %v61
    %v223 = vmul.f32 %v207, %v61
    %v224 = vmul.f32 %v208, %v61
    %v225 = vmul.f32 %v209, %v61
    %v226 = vmul.f32 %v210, %v61
    %v227 = vmul.f32 %v211, %v61
    %v228 = vmul.f32 %v212, %v61
    %v229 = vperm.slane %v53, 0
    %v230 = vperm.slane %v198, 0
    %v231 = vperm.slane %v199, 0
    %v232 = vperm.slane %v200, 0
    %v233 = vperm.slane %v201, 0
    %v234 = vperm.slane %v202, 0
    %v235 = vperm.slane %v203, 0
    %v236 = vperm.slane %v204, 0
    %v245 = vmul.f32 %v229, %v70
    %v246 = vmul.f32 %v230, %v70
    %v247 = vmul.f32 %v231, %v70
    %v248 = vmul.f32 %v232, %v70
    %v249 = vmul.f32 %v233, %v70
    %v250 = vmul.f32 %v234, %v70
    %v251 = vmul.f32 %v235, %v70
    %v252 = vmul.f32 %v236, %v70
    %v253 = vsub.f32 %v221, %v245
    %v254 = vsub.f32 %v222, %v246
    %v255 = vsub.f32 %v223, %v247
    %v256 = vsub.f32 %v224, %v248
    %v257 = vsub.f32 %v225, %v249
    %v258 = vsub.f32 %v226, %v250
    %v259 = vsub.f32 %v227, %v251
    %v260 = vsub.f32 %v228, %v252
    %v261 = vadd.f32 %v149, %v253
    %v262 = vadd.f32 %v150, %v254
    %v263 = vadd.f32 %v151, %v255
    %v264 = vadd.f32 %v152, %v256
    %v265 = vadd.f32 %v153, %v257
    %v266 = vadd.f32 %v154, %v258
    %v267 = vadd.f32 %v155, %v259
    %v268 = vadd.f32 %v156, %v260
    %v269 = vmul.f32 %v205, %v70
    %v270 = vmul.f32 %v206, %v70
    %v271 = vmul.f32 %v207, %v70
    %v272 = vmul.f32 %v208, %v70
    %v273 = vmul.f32 %v209, %v70
    %v274 = vmul.f32 %v210, %v70
    %v275 = vmul.f32 %v211, %v70
    %v276 = vmul.f32 %v212, %v70
    %v277 = vmul.f32 %v229, %v61
    %v278 = vmul.f32 %v230, %v61
    %v279 = vmul.f32 %v231, %v61
    %v280 = vmul.f32 %v232, %v61
    %v281 = vmul.f32 %v233, %v61
    %v282 = vmul.f32 %v234, %v61
    %v283 = vmul.f32 %v235, %v61
    %v284 = vmul.f32 %v236, %v61
    %v285 = vadd.f32 %v269, %v277
    %v286 = vadd.f32 %v270, %v278
    %v287 = vadd.f32 %v271, %v279
    %v288 = vadd.f32 %v272, %v280
    %v289 = vadd.f32 %v273, %v281
    %v290 = vadd.f32 %v274, %v282
    %v291 = vadd.f32 %v275, %v283
    %v292 = vadd.f32 %v276, %v284
    %v293 = vadd.f32 %v181, %v285
    %v294 = vadd.f32 %v182, %v286
    %v295 = vadd.f32 %v183, %v287
    %v296 = vadd.f32 %v184, %v288
    %v297 = vadd.f32 %v185, %v289
    %v298 = vadd.f32 %v186, %v290
    %v299 = vadd.f32 %v187, %v291
    %v300 = vadd.f32 %v188, %v292
    %v302 = vrot.slane %v45, 1
    %v303 = vrot.slane %v45, 2
    %v304 = vrot.slane %v45, 3
    %v305 = vrot.slane %v45, 4
    %v306 = vrot.slane %v45, 5
    %v307 = vrot.slane %v45, 6
    %v308 = vrot.slane %v45, 7
    %v310 = vrot.slane %v54, 1
    %v311 = vrot.slane %v54, 2
    %v312 = vrot.slane %v54, 3
    %v313 = vrot.slane %v54, 4
    %v314 = vrot.slane %v54, 5
    %v315 = vrot.slane %v54, 6
    %v316 = vrot.slane %v54, 7
    %v317 = vperm.slane %v45, 0
    %v318 = vperm.slane %v302, 0
    %v319 = vperm.slane %v303, 0
    %v320 = vperm.slane %v304, 0
    %v321 = vperm.slane %v305, 0
    %v322 = vperm.slane %v306, 0
    %v323 = vperm.slane %v307, 0
    %v324 = vperm.slane %v308, 0
    %v333 = vmul.f32 %v317, %v62
    %v334 = vmul.f32 %v318, %v62
    %v335 = vmul.f32 %v319, %v62
    %v336 = vmul.f32 %v320, %v62
    %v337 = vmul.f32 %v321, %v62
    %v338 = vmul.f32 %v322, %v62
    %v339 = vmul.f32 %v323, %v62
    %v340 = vmul.f32 %v324, %v62
    %v341 = vperm.slane %v54, 0
    %v342 = vperm.slane %v310, 0
    %v343 = vperm.slane %v311, 0
    %v344 = vperm.slane %v312, 0
    %v345 = vperm.slane %v313, 0
    %v346 = vperm.slane %v314, 0
    %v347 = vperm.slane %v315, 0
    %v348 = vperm.slane %v316, 0
    %v357 = vmul.f32 %v341, %v71
    %v358 = vmul.f32 %v342, %v71
    %v359 = vmul.f32 %v343, %v71
    %v360 = vmul.f32 %v344, %v71
    %v361 = vmul.f32 %v345, %v71
    %v362 = vmul.f32 %v346, %v71
    %v363 = vmul.f32 %v347, %v71
    %v364 = vmul.f32 %v348, %v71
    %v365 = vsub.f32 %v333, %v357
    %v366 = vsub.f32 %v334, %v358
    %v367 = vsub.f32 %v335, %v359
    %v368 = vsub.f32 %v336, %v360
    %v369 = vsub.f32 %v337, %v361
    %v370 = vsub.f32 %v338, %v362
    %v371 = vsub.f32 %v339, %v363
    %v372 = vsub.f32 %v340, %v364
    %v373 = vadd.f32 %v261, %v365
    %v374 = vadd.f32 %v262, %v366
    %v375 = vadd.f32 %v263, %v367
    %v376 = vadd.f32 %v264, %v368
    %v377 = vadd.f32 %v265, %v369
    %v378 = vadd.f32 %v266, %v370
    %v379 = vadd.f32 %v267, %v371
    %v380 = vadd.f32 %v268, %v372
    %v381 = vmul.f32 %v317, %v71
    %v382 = vmul.f32 %v318, %v71
    %v383 = vmul.f32 %v319, %v71
    %v384 = vmul.f32 %v320, %v71
    %v385 = vmul.f32 %v321, %v71
    %v386 = vmul.f32 %v322, %v71
    %v387 = vmul.f32 %v323, %v71
    %v388 = vmul.f32 %v324, %v71
    %v389 = vmul.f32 %v341, %v62
    %v390 = vmul.f32 %v342, %v62
    %v391 = vmul.f32 %v343, %v62
    %v392 = vmul.f32 %v344, %v62
    %v393 = vmul.f32 %v345, %v62
    %v394 = vmul.f32 %v346, %v62
    %v395 = vmul.f32 %v347, %v62
    %v396 = vmul.f32 %v348, %v62
    %v397 = vadd.f32 %v381, %v389
    %v398 = vadd.f32 %v382, %v390
    %v399 = vadd.f32 %v383, %v391
    %v400 = vadd.f32 %v384, %v392
    %v401 = vadd.f32 %v385, %v393
    %v402 = vadd.f32 %v386, %v394
    %v403 = vadd.f32 %v387, %v395
    %v404 = vadd.f32 %v388, %v396
    %v405 = vadd.f32 %v293, %v397
    %v406 = vadd.f32 %v294, %v398
    %v407 = vadd.f32 %v295, %v399
    %v408 = vadd.f32 %v296, %v400
    %v409 = vadd.f32 %v297, %v401
    %v410 = vadd.f32 %v298, %v402
    %v411 = vadd.f32 %v299, %v403
    %v412 = vadd.f32 %v300, %v404
    %v414 = vrot.slane %v46, 1
    %v415 = vrot.slane %v46, 2
    %v416 = vrot.slane %v46, 3
    %v417 = vrot.slane %v46, 4
    %v418 = vrot.slane %v46, 5
    %v419 = vrot.slane %v46, 6
    %v420 = vrot.slane %v46, 7
    %v422 = vrot.slane %v55, 1
    %v423 = vrot.slane %v55, 2
    %v424 = vrot.slane %v55, 3
    %v425 = vrot.slane %v55, 4
    %v426 = vrot.slane %v55, 5
    %v427 = vrot.slane %v55, 6
    %v428 = vrot.slane %v55, 7
    %v429 = vperm.slane %v46, 0
    %v430 = vperm.slane %v414, 0
    %v431 = vperm.slane %v415, 0
    %v432 = vperm.slane %v416, 0
    %v433 = vperm.slane %v417, 0
    %v434 = vperm.slane %v418, 0
    %v435 = vperm.slane %v419, 0
    %v436 = vperm.slane %v420, 0
    %v445 = vmul.f32 %v429, %v63
    %v446 = vmul.f32 %v430, %v63
    %v447 = vmul.f32 %v431, %v63
    %v448 = vmul.f32 %v432, %v63
    %v449 = vmul.f32 %v433, %v63
    %v450 = vmul.f32 %v434, %v63
    %v451 = vmul.f32 %v435, %v63
    %v452 = vmul.f32 %v436, %v63
    %v453 = vperm.slane %v55, 0
    %v454 = vperm.slane %v422, 0
    %v455 = vperm.slane %v423, 0
    %v456 = vperm.slane %v424, 0
    %v457 = vperm.slane %v425, 0
    %v458 = vperm.slane %v426, 0
    %v459 = vperm.slane %v427, 0
    %v460 = vperm.slane %v428, 0
    %v469 = vmul.f32 %v453, %v72
    %v470 = vmul.f32 %v454, %v72
    %v471 = vmul.f32 %v455, %v72
    %v472 = vmul.f32 %v456, %v72
    %v473 = vmul.f32 %v457, %v72
    %v474 = vmul.f32 %v458, %v72
    %v475 = vmul.f32 %v459, %v72
    %v476 = vmul.f32 %v460, %v72
    %v477 = vsub.f32 %v445, %v469
    %v478 = vsub.f32 %v446, %v470
    %v479 = vsub.f32 %v447, %v471
    %v480 = vsub.f32 %v448, %v472
    %v481 = vsub.f32 %v449, %v473
    %v482 = vsub.f32 %v450, %v474
    %v483 = vsub.f32 %v451, %v475
    %v484 = vsub.f32 %v452, %v476
    %v485 = vadd.f32 %v373, %v477
    %v486 = vadd.f32 %v374, %v478
    %v487 = vadd.f32 %v375, %v479
    %v488 = vadd.f32 %v376, %v480
    %v489 = vadd.f32 %v377, %v481
    %v490 = vadd.f32 %v378, %v482
    %v491 = vadd.f32 %v379, %v483
    %v492 = vadd.f32 %v380, %v484
    %v493 = vmul.f32 %v429, %v72
    %v494 = vmul.f32 %v430, %v72
    %v495 = vmul.f32 %v431, %v72
    %v496 = vmul.f32 %v432, %v72
    %v497 = vmul.f32 %v433, %v72
    %v498 = vmul.f32 %v434, %v72
    %v499 = vmul.f32 %v435, %v72
    %v500 = vmul.f32 %v436, %v72
    %v501 = vmul.f32 %v453, %v63
    %v502 = vmul.f32 %v454, %v63
    %v503 = vmul.f32 %v455, %v63
    %v504 = vmul.f32 %v456, %v63
    %v505 = vmul.f32 %v457, %v63
    %v506 = vmul.f32 %v458, %v63
    %v507 = vmul.f32 %v459, %v63
    %v508 = vmul.f32 %v460, %v63
    %v509 = vadd.f32 %v493, %v501
    %v510 = vadd.f32 %v494, %v502
    %v511 = vadd.f32 %v495, %v503
    %v512 = vadd.f32 %v496, %v504
    %v513 = vadd.f32 %v497, %v505
    %v514 = vadd.f32 %v498, %v506
    %v515 = vadd.f32 %v499, %v507
    %v516 = vadd.f32 %v500, %v508
    %v517 = vadd.f32 %v405, %v509
    %v518 = vadd.f32 %v406, %v510
    %v519 = vadd.f32 %v407, %v511
    %v520 = vadd.f32 %v408, %v512
    %v521 = vadd.f32 %v409, %v513
    %v522 = vadd.f32 %v410, %v514
    %v523 = vadd.f32 %v411, %v515
    %v524 = vadd.f32 %v412, %v516
    %v526 = vrot.slane %v47, 1
    %v527 = vrot.slane %v47, 2
    %v528 = vrot.slane %v47, 3
    %v529 = vrot.slane %v47, 4
    %v530 = vrot.slane %v47, 5
    %v531 = vrot.slane %v47, 6
    %v532 = vrot.slane %v47, 7
    %v534 = vrot.slane %v56, 1
    %v535 = vrot.slane %v56, 2
    %v536 = vrot.slane %v56, 3
    %v537 = vrot.slane %v56, 4
    %v538 = vrot.slane %v56, 5
    %v539 = vrot.slane %v56, 6
    %v540 = vrot.slane %v56, 7
    %v541 = vperm.slane %v47, 0
    %v542 = vperm.slane %v526, 0
    %v543 = vperm.slane %v527, 0
    %v544 = vperm.slane %v528, 0
    %v545 = vperm.slane %v529, 0
    %v546 = vperm.slane %v530, 0
    %v547 = vperm.slane %v531, 0
    %v548 = vperm.slane %v532, 0
    %v557 = vmul.f32 %v541, %v64
    %v558 = vmul.f32 %v542, %v64
    %v559 = vmul.f32 %v543, %v64
    %v560 = vmul.f32 %v544, %v64
    %v561 = vmul.f32 %v545, %v64
    %v562 = vmul.f32 %v546, %v64
    %v563 = vmul.f32 %v547, %v64
    %v564 = vmul.f32 %v548, %v64
    %v565 = vperm.slane %v56, 0
    %v566 = vperm.slane %v534, 0
    %v567 = vperm.slane %v535, 0
    %v568 = vperm.slane %v536, 0
    %v569 = vperm.slane %v537, 0
    %v570 = vperm.slane %v538, 0
    %v571 = vperm.slane %v539, 0
    %v572 = vperm.slane %v540, 0
    %v581 = vmul.f32 %v565, %v73
    %v582 = vmul.f32 %v566, %v73
    %v583 = vmul.f32 %v567, %v73
    %v584 = vmul.f32 %v568, %v73
    %v585 = vmul.f32 %v569, %v73
    %v586 = vmul.f32 %v570, %v73
    %v587 = vmul.f32 %v571, %v73
    %v588 = vmul.f32 %v572, %v73
    %v589 = vsub.f32 %v557, %v581
    %v590 = vsub.f32 %v558, %v582
    %v591 = vsub.f32 %v559, %v583
    %v592 = vsub.f32 %v560, %v584
    %v593 = vsub.f32 %v561, %v585
    %v594 = vsub.f32 %v562, %v586
    %v595 = vsub.f32 %v563, %v587
    %v596 = vsub.f32 %v564, %v588
    %v597 = vadd.f32 %v485, %v589
    %v598 = vadd.f32 %v486, %v590
    %v599 = vadd.f32 %v487, %v591
    %v600 = vadd.f32 %v488, %v592
    %v601 = vadd.f32 %v489, %v593
    %v602 = vadd.f32 %v490, %v594
    %v603 = vadd.f32 %v491, %v595
    %v604 = vadd.f32 %v492, %v596
    %v605 = vmul.f32 %v541, %v73
    %v606 = vmul.f32 %v542, %v73
    %v607 = vmul.f32 %v543, %v73
    %v608 = vmul.f32 %v544, %v73
    %v609 = vmul.f32 %v545, %v73
    %v610 = vmul.f32 %v546, %v73
    %v611 = vmul.f32 %v547, %v73
    %v612 = vmul.f32 %v548, %v73
    %v613 = vmul.f32 %v565, %v64
    %v614 = vmul.f32 %v566, %v64
    %v615 = vmul.f32 %v567, %v64
    %v616 = vmul.f32 %v568, %v64
    %v617 = vmul.f32 %v569, %v64
    %v618 = vmul.f32 %v570, %v64
    %v619 = vmul.f32 %v571, %v64
    %v620 = vmul.f32 %v572, %v64
    %v621 = vadd.f32 %v605, %v613
    %v622 = vadd.f32 %v606, %v614
    %v623 = vadd.f32 %v607, %v615
    %v624 = vadd.f32 %v608, %v616
    %v625 = vadd.f32 %v609, %v617
    %v626 = vadd.f32 %v610, %v618
    %v627 = vadd.f32 %v611, %v619
    %v628 = vadd.f32 %v612, %v620
    %v629 = vadd.f32 %v517, %v621
    %v630 = vadd.f32 %v518, %v622
    %v631 = vadd.f32 %v519, %v623
    %v632 = vadd.f32 %v520, %v624
    %v633 = vadd.f32 %v521, %v625
    %v634 = vadd.f32 %v522, %v626
    %v635 = vadd.f32 %v523, %v627
    %v636 = vadd.f32 %v524, %v628
    %v638 = vrot.slane %v48, 1
    %v639 = vrot.slane %v48, 2
    %v640 = vrot.slane %v48, 3
    %v641 = vrot.slane %v48, 4
    %v642 = vrot.slane %v48, 5
    %v643 = vrot.slane %v48, 6
    %v644 = vrot.slane %v48, 7
    %v646 = vrot.slane %v57, 1
    %v647 = vrot.slane %v57, 2
    %v648 = vrot.slane %v57, 3
    %v649 = vrot.slane %v57, 4
    %v650 = vrot.slane %v57, 5
    %v651 = vrot.slane %v57, 6
    %v652 = vrot.slane %v57, 7
    %v653 = vperm.slane %v48, 0
    %v654 = vperm.slane %v638, 0
    %v655 = vperm.slane %v639, 0
    %v656 = vperm.slane %v640, 0
    %v657 = vperm.slane %v641, 0
    %v658 = vperm.slane %v642, 0
    %v659 = vperm.slane %v643, 0
    %v660 = vperm.slane %v644, 0
    %v669 = vmul.f32 %v653, %v65
    %v670 = vmul.f32 %v654, %v65
    %v671 = vmul.f32 %v655, %v65
    %v672 = vmul.f32 %v656, %v65
    %v673 = vmul.f32 %v657, %v65
    %v674 = vmul.f32 %v658, %v65
    %v675 = vmul.f32 %v659, %v65
    %v676 = vmul.f32 %v660, %v65
    %v677 = vperm.slane %v57, 0
    %v678 = vperm.slane %v646, 0
    %v679 = vperm.slane %v647, 0
    %v680 = vperm.slane %v648, 0
    %v681 = vperm.slane %v649, 0
    %v682 = vperm.slane %v650, 0
    %v683 = vperm.slane %v651, 0
    %v684 = vperm.slane %v652, 0
    %v693 = vmul.f32 %v677, %v74
    %v694 = vmul.f32 %v678, %v74
    %v695 = vmul.f32 %v679, %v74
    %v696 = vmul.f32 %v680, %v74
    %v697 = vmul.f32 %v681, %v74
    %v698 = vmul.f32 %v682, %v74
    %v699 = vmul.f32 %v683, %v74
    %v700 = vmul.f32 %v684, %v74
    %v701 = vsub.f32 %v669, %v693
    %v702 = vsub.f32 %v670, %v694
    %v703 = vsub.f32 %v671, %v695
    %v704 = vsub.f32 %v672, %v696
    %v705 = vsub.f32 %v673, %v697
    %v706 = vsub.f32 %v674, %v698
    %v707 = vsub.f32 %v675, %v699
    %v708 = vsub.f32 %v676, %v700
    %v709 = vadd.f32 %v597, %v701
    %v710 = vadd.f32 %v598, %v702
    %v711 = vadd.f32 %v599, %v703
    %v712 = vadd.f32 %v600, %v704
    %v713 = vadd.f32 %v601, %v705
    %v714 = vadd.f32 %v602, %v706
    %v715 = vadd.f32 %v603, %v707
    %v716 = vadd.f32 %v604, %v708
    %v717 = vmul.f32 %v653, %v74
    %v718 = vmul.f32 %v654, %v74
    %v719 = vmul.f32 %v655, %v74
    %v720 = vmul.f32 %v656, %v74
    %v721 = vmul.f32 %v657, %v74
    %v722 = vmul.f32 %v658, %v74
    %v723 = vmul.f32 %v659, %v74
    %v724 = vmul.f32 %v660, %v74
    %v725 = vmul.f32 %v677, %v65
    %v726 = vmul.f32 %v678, %v65
    %v727 = vmul.f32 %v679, %v65
    %v728 = vmul.f32 %v680, %v65
    %v729 = vmul.f32 %v681, %v65
    %v730 = vmul.f32 %v682, %v65
    %v731 = vmul.f32 %v683, %v65
    %v732 = vmul.f32 %v684, %v65
    %v733 = vadd.f32 %v717, %v725
    %v734 = vadd.f32 %v718, %v726
    %v735 = vadd.f32 %v719, %v727
    %v736 = vadd.f32 %v720, %v728
    %v737 = vadd.f32 %v721, %v729
    %v738 = vadd.f32 %v722, %v730
    %v739 = vadd.f32 %v723, %v731
    %v740 = vadd.f32 %v724, %v732
    %v741 = vadd.f32 %v629, %v733
    %v742 = vadd.f32 %v630, %v734
    %v743 = vadd.f32 %v631, %v735
    %v744 = vadd.f32 %v632, %v736
    %v745 = vadd.f32 %v633, %v737
    %v746 = vadd.f32 %v634, %v738
    %v747 = vadd.f32 %v635, %v739
    %v748 = vadd.f32 %v636, %v740
    %v750 = vrot.slane %v49, 1
    %v751 = vrot.slane %v49, 2
    %v752 = vrot.slane %v49, 3
    %v753 = vrot.slane %v49, 4
    %v754 = vrot.slane %v49, 5
    %v755 = vrot.slane %v49, 6
    %v756 = vrot.slane %v49, 7
    %v758 = vrot.slane %v58, 1
    %v759 = vrot.slane %v58, 2
    %v760 = vrot.slane %v58, 3
    %v761 = vrot.slane %v58, 4
    %v762 = vrot.slane %v58, 5
    %v763 = vrot.slane %v58, 6
    %v764 = vrot.slane %v58, 7
    %v765 = vperm.slane %v49, 0
    %v766 = vperm.slane %v750, 0
    %v767 = vperm.slane %v751, 0
    %v768 = vperm.slane %v752, 0
    %v769 = vperm.slane %v753, 0
    %v770 = vperm.slane %v754, 0
    %v771 = vperm.slane %v755, 0
    %v772 = vperm.slane %v756, 0
    %v781 = vmul.f32 %v765, %v66
    %v782 = vmul.f32 %v766, %v66
    %v783 = vmul.f32 %v767, %v66
    %v784 = vmul.f32 %v768, %v66
    %v785 = vmul.f32 %v769, %v66
    %v786 = vmul.f32 %v770, %v66
    %v787 = vmul.f32 %v771, %v66
    %v788 = vmul.f32 %v772, %v66
    %v789 = vperm.slane %v58, 0
    %v790 = vperm.slane %v758, 0
    %v791 = vperm.slane %v759, 0
    %v792 = vperm.slane %v760, 0
    %v793 = vperm.slane %v761, 0
    %v794 = vperm.slane %v762, 0
    %v795 = vperm.slane %v763, 0
    %v796 = vperm.slane %v764, 0
    %v805 = vmul.f32 %v789, %v75
    %v806 = vmul.f32 %v790, %v75
    %v807 = vmul.f32 %v791, %v75
    %v808 = vmul.f32 %v792, %v75
    %v809 = vmul.f32 %v793, %v75
    %v810 = vmul.f32 %v794, %v75
    %v811 = vmul.f32 %v795, %v75
    %v812 = vmul.f32 %v796, %v75
    %v813 = vsub.f32 %v781, %v805
    %v814 = vsub.f32 %v782, %v806
    %v815 = vsub.f32 %v783, %v807
    %v816 = vsub.f32 %v784, %v808
    %v817 = vsub.f32 %v785, %v809
    %v818 = vsub.f32 %v786, %v810
    %v819 = vsub.f32 %v787, %v811
    %v820 = vsub.f32 %v788, %v812
    %v821 = vadd.f32 %v709, %v813
    %v822 = vadd.f32 %v710, %v814
    %v823 = vadd.f32 %v711, %v815
    %v824 = vadd.f32 %v712, %v816
    %v825 = vadd.f32 %v713, %v817
    %v826 = vadd.f32 %v714, %v818
    %v827 = vadd.f32 %v715, %v819
    %v828 = vadd.f32 %v716, %v820
    %v829 = vmul.f32 %v765, %v75
    %v830 = vmul.f32 %v766, %v75
    %v831 = vmul.f32 %v767, %v75
    %v832 = vmul.f32 %v768, %v75
    %v833 = vmul.f32 %v769, %v75
    %v834 = vmul.f32 %v770, %v75
    %v835 = vmul.f32 %v771, %v75
    %v836 = vmul.f32 %v772, %v75
    %v837 = vmul.f32 %v789, %v66
    %v838 = vmul.f32 %v790, %v66
    %v839 = vmul.f32 %v791, %v66
    %v840 = vmul.f32 %v792, %v66
    %v841 = vmul.f32 %v793, %v66
    %v842 = vmul.f32 %v794, %v66
    %v843 = vmul.f32 %v795, %v66
    %v844 = vmul.f32 %v796, %v66
    %v845 = vadd.f32 %v829, %v837
    %v846 = vadd.f32 %v830, %v838
    %v847 = vadd.f32 %v831, %v839
    %v848 = vadd.f32 %v832, %v840
    %v849 = vadd.f32 %v833, %v841
    %v850 = vadd.f32 %v834, %v842
    %v851 = vadd.f32 %v835, %v843
    %v852 = vadd.f32 %v836, %v844
    %v853 = vadd.f32 %v741, %v845
    %v854 = vadd.f32 %v742, %v846
    %v855 = vadd.f32 %v743, %v847
    %v856 = vadd.f32 %v744, %v848
    %v857 = vadd.f32 %v745, %v849
    %v858 = vadd.f32 %v746, %v850
    %v859 = vadd.f32 %v747, %v851
    %v860 = vadd.f32 %v748, %v852
    %v862 = vrot.slane %v50, 1
    %v863 = vrot.slane %v50, 2
    %v864 = vrot.slane %v50, 3
    %v865 = vrot.slane %v50, 4
    %v866 = vrot.slane %v50, 5
    %v867 = vrot.slane %v50, 6
    %v868 = vrot.slane %v50, 7
    %v870 = vrot.slane %v59, 1
    %v871 = vrot.slane %v59, 2
    %v872 = vrot.slane %v59, 3
    %v873 = vrot.slane %v59, 4
    %v874 = vrot.slane %v59, 5
    %v875 = vrot.slane %v59, 6
    %v876 = vrot.slane %v59, 7
    %v877 = vperm.slane %v50, 0
    %v878 = vperm.slane %v862, 0
    %v879 = vperm.slane %v863, 0
    %v880 = vperm.slane %v864, 0
    %v881 = vperm.slane %v865, 0
    %v882 = vperm.slane %v866, 0
    %v883 = vperm.slane %v867, 0
    %v884 = vperm.slane %v868, 0
    %v893 = vmul.f32 %v877, %v67
    %v894 = vmul.f32 %v878, %v67
    %v895 = vmul.f32 %v879, %v67
    %v896 = vmul.f32 %v880, %v67
    %v897 = vmul.f32 %v881, %v67
    %v898 = vmul.f32 %v882, %v67
    %v899 = vmul.f32 %v883, %v67
    %v900 = vmul.f32 %v884, %v67
    %v901 = vperm.slane %v59, 0
    %v902 = vperm.slane %v870, 0
    %v903 = vperm.slane %v871, 0
    %v904 = vperm.slane %v872, 0
    %v905 = vperm.slane %v873, 0
    %v906 = vperm.slane %v874, 0
    %v907 = vperm.slane %v875, 0
    %v908 = vperm.slane %v876, 0
    %v917 = vmul.f32 %v901, %v76
    %v918 = vmul.f32 %v902, %v76
    %v919 = vmul.f32 %v903, %v76
    %v920 = vmul.f32 %v904, %v76
    %v921 = vmul.f32 %v905, %v76
    %v922 = vmul.f32 %v906, %v76
    %v923 = vmul.f32 %v907, %v76
    %v924 = vmul.f32 %v908, %v76
    %v925 = vsub.f32 %v893, %v917
    %v926 = vsub.f32 %v894, %v918
    %v927 = vsub.f32 %v895, %v919
    %v928 = vsub.f32 %v896, %v920
    %v929 = vsub.f32 %v897, %v921
    %v930 = vsub.f32 %v898, %v922
    %v931 = vsub.f32 %v899, %v923
    %v932 = vsub.f32 %v900, %v924
    %v933 = vadd.f32 %v821, %v925
    %v934 = vadd.f32 %v822, %v926
    %v935 = vadd.f32 %v823, %v927
    %v936 = vadd.f32 %v824, %v928
    %v937 = vadd.f32 %v825, %v929
    %v938 = vadd.f32 %v826, %v930
    %v939 = vadd.f32 %v827, %v931
    %v940 = vadd.f32 %v828, %v932
    %v941 = vmul.f32 %v877, %v76
    %v942 = vmul.f32 %v878, %v76
    %v943 = vmul.f32 %v879, %v76
    %v944 = vmul.f32 %v880, %v76
    %v945 = vmul.f32 %v881, %v76
    %v946 = vmul.f32 %v882, %v76
    %v947 = vmul.f32 %v883, %v76
    %v948 = vmul.f32 %v884, %v76
    %v949 = vmul.f32 %v901, %v67
    %v950 = vmul.f32 %v902, %v67
    %v951 = vmul.f32 %v903, %v67
    %v952 = vmul.f32 %v904, %v67
    %v953 = vmul.f32 %v905, %v67
    %v954 = vmul.f32 %v906, %v67
    %v955 = vmul.f32 %v907, %v67
    %v956 = vmul.f32 %v908, %v67
    %v957 = vadd.f32 %v941, %v949
    %v958 = vadd.f32 %v942, %v950
    %v959 = vadd.f32 %v943, %v951
    %v960 = vadd.f32 %v944, %v952
    %v961 = vadd.f32 %v945, %v953
    %v962 = vadd.f32 %v946, %v954
    %v963 = vadd.f32 %v947, %v955
    %v964 = vadd.f32 %v948, %v956
    %v965 = vadd.f32 %v853, %v957
    %v966 = vadd.f32 %v854, %v958
    %v967 = vadd.f32 %v855, %v959
    %v968 = vadd.f32 %v856, %v960
    %v969 = vadd.f32 %v857, %v961
    %v970 = vadd.f32 %v858, %v962
    %v971 = vadd.f32 %v859, %v963
    %v972 = vadd.f32 %v860, %v964
    %v973 = vtanh.pop %v933
    %v974 = vtanh.pop %v934
    %v975 = vtanh.pop %v935
    %v976 = vtanh.pop %v936
    %v977 = vtanh.pop %v937
    %v978 = vtanh.pop %v938
    %v979 = vtanh.pop %v939
    %v980 = vtanh.pop %v940
    %v981 = vtanh.pop %v965
    %v982 = vtanh.pop %v966
    %v983 = vtanh.pop %v967
    %v984 = vtanh.pop %v968
    %v985 = vtanh.pop %v969
    %v986 = vtanh.pop %v970
    %v987 = vtanh.pop %v971
    %v988 = vtanh.pop %v972
    %v989 = vmul.f32 %v973, %v60
    %v990 = vmul.f32 %v974, %v60
    %v991 = vmul.f32 %v975, %v60
    %v992 = vmul.f32 %v976, %v60
    %v993 = vmul.f32 %v977, %v60
    %v994 = vmul.f32 %v978, %v60
    %v995 = vmul.f32 %v979, %v60
    %v996 = vmul.f32 %v980, %v60
    %v997 = vmul.f32 %v981, %v69
    %v998 = vmul.f32 %v982, %v69
    %v999 = vmul.f32 %v983, %v69
    %v1000 = vmul.f32 %v984, %v69
    %v1001 = vmul.f32 %v985, %v69
    %v1002 = vmul.f32 %v986, %v69
    %v1003 = vmul.f32 %v987, %v69
    %v1004 = vmul.f32 %v988, %v69
    %v1005 = vsub.f32 %v989, %v997
    %v1006 = vsub.f32 %v990, %v998
    %v1007 = vsub.f32 %v991, %v999
    %v1008 = vsub.f32 %v992, %v1000
    %v1009 = vsub.f32 %v993, %v1001
    %v1010 = vsub.f32 %v994, %v1002
    %v1011 = vsub.f32 %v995, %v1003
    %v1012 = vsub.f32 %v996, %v1004
    %v1013 = vrot.slane %v1005, 4
    %v1014 = vadd.f32 %v1005, %v1013
    %v1015 = vrot.slane %v1014, 2
    %v1016 = vadd.f32 %v1014, %v1015
    %v1017 = vrot.slane %v1016, 1
    %v1018 = vadd.f32 %v1016, %v1017
    %v1019 = vrot.slane %v1006, 4
    %v1020 = vadd.f32 %v1006, %v1019
    %v1021 = vrot.slane %v1020, 2
    %v1022 = vadd.f32 %v1020, %v1021
    %v1023 = vrot.slane %v1022, 1
    %v1024 = vadd.f32 %v1022, %v1023
    %v1025 = vrot.slane %v1007, 4
    %v1026 = vadd.f32 %v1007, %v1025
    %v1027 = vrot.slane %v1026, 2
    %v1028 = vadd.f32 %v1026, %v1027
    %v1029 = vrot.slane %v1028, 1
    %v1030 = vadd.f32 %v1028, %v1029
    %v1031 = vrot.slane %v1008, 4
    %v1032 = vadd.f32 %v1008, %v1031
    %v1033 = vrot.slane %v1032, 2
    %v1034 = vadd.f32 %v1032, %v1033
    %v1035 = vrot.slane %v1034, 1
    %v1036 = vadd.f32 %v1034, %v1035
    %v1037 = vrot.slane %v1009, 4
    %v1038 = vadd.f32 %v1009, %v1037
    %v1039 = vrot.slane %v1038, 2
    %v1040 = vadd.f32 %v1038, %v1039
    %v1041 = vrot.slane %v1040, 1
    %v1042 = vadd.f32 %v1040, %v1041
    %v1043 = vrot.slane %v1010, 4
    %v1044 = vadd.f32 %v1010, %v1043
    %v1045 = vrot.slane %v1044, 2
    %v1046 = vadd.f32 %v1044, %v1045
    %v1047 = vrot.slane %v1046, 1
    %v1048 = vadd.f32 %v1046, %v1047
    %v1049 = vrot.slane %v1011, 4
    %v1050 = vadd.f32 %v1011, %v1049
    %v1051 = vrot.slane %v1050, 2
    %v1052 = vadd.f32 %v1050, %v1051
    %v1053 = vrot.slane %v1052, 1
    %v1054 = vadd.f32 %v1052, %v1053
    %v1055 = vrot.slane %v1012, 4
    %v1056 = vadd.f32 %v1012, %v1055
    %v1057 = vrot.slane %v1056, 2
    %v1058 = vadd.f32 %v1056, %v1057
    %v1059 = vrot.slane %v1058, 1
    %v1060 = vadd.f32 %v1058, %v1059
    %v1061 = vmul.f32 %v973, %v69
    %v1062 = vmul.f32 %v974, %v69
    %v1063 = vmul.f32 %v975, %v69
    %v1064 = vmul.f32 %v976, %v69
    %v1065 = vmul.f32 %v977, %v69
    %v1066 = vmul.f32 %v978, %v69
    %v1067 = vmul.f32 %v979, %v69
    %v1068 = vmul.f32 %v980, %v69
    %v1069 = vmul.f32 %v981, %v60
    %v1070 = vmul.f32 %v982, %v60
    %v1071 = vmul.f32 %v983, %v60
    %v1072 = vmul.f32 %v984, %v60
    %v1073 = vmul.f32 %v985, %v60
    %v1074 = vmul.f32 %v986, %v60
    %v1075 = vmul.f32 %v987, %v60
    %v1076 = vmul.f32 %v988, %v60
    %v1077 = vadd.f32 %v1061, %v1069
    %v1078 = vadd.f32 %v1062, %v1070
    %v1079 = vadd.f32 %v1063, %v1071
    %v1080 = vadd.f32 %v1064, %v1072
    %v1081 = vadd.f32 %v1065, %v1073
    %v1082 = vadd.f32 %v1066, %v1074
    %v1083 = vadd.f32 %v1067, %v1075
    %v1084 = vadd.f32 %v1068, %v1076
    %v1085 = vrot.slane %v1077, 4
    %v1086 = vadd.f32 %v1077, %v1085
    %v1087 = vrot.slane %v1086, 2
    %v1088 = vadd.f32 %v1086, %v1087
    %v1089 = vrot.slane %v1088, 1
    %v1090 = vadd.f32 %v1088, %v1089
    %v1091 = vrot.slane %v1078, 4
    %v1092 = vadd.f32 %v1078, %v1091
    %v1093 = vrot.slane %v1092, 2
    %v1094 = vadd.f32 %v1092, %v1093
    %v1095 = vrot.slane %v1094, 1
    %v1096 = vadd.f32 %v1094, %v1095
    %v1097 = vrot.slane %v1079, 4
    %v1098 = vadd.f32 %v1079, %v1097
    %v1099 = vrot.slane %v1098, 2
    %v1100 = vadd.f32 %v1098, %v1099
    %v1101 = vrot.slane %v1100, 1
    %v1102 = vadd.f32 %v1100, %v1101
    %v1103 = vrot.slane %v1080, 4
    %v1104 = vadd.f32 %v1080, %v1103
    %v1105 = vrot.slane %v1104, 2
    %v1106 = vadd.f32 %v1104, %v1105
    %v1107 = vrot.slane %v1106, 1
    %v1108 = vadd.f32 %v1106, %v1107
    %v1109 = vrot.slane %v1081, 4
    %v1110 = vadd.f32 %v1081, %v1109
    %v1111 = vrot.slane %v1110, 2
    %v1112 = vadd.f32 %v1110, %v1111
    %v1113 = vrot.slane %v1112, 1
    %v1114 = vadd.f32 %v1112, %v1113
    %v1115 = vrot.slane %v1082, 4
    %v1116 = vadd.f32 %v1082, %v1115
    %v1117 = vrot.slane %v1116, 2
    %v1118 = vadd.f32 %v1116, %v1117
    %v1119 = vrot.slane %v1118, 1
    %v1120 = vadd.f32 %v1118, %v1119
    %v1121 = vrot.slane %v1083, 4
    %v1122 = vadd.f32 %v1083, %v1121
    %v1123 = vrot.slane %v1122, 2
    %v1124 = vadd.f32 %v1122, %v1123
    %v1125 = vrot.slane %v1124, 1
    %v1126 = vadd.f32 %v1124, %v1125
    %v1127 = vrot.slane %v1084, 4
    %v1128 = vadd.f32 %v1084, %v1127
    %v1129 = vrot.slane %v1128, 2
    %v1130 = vadd.f32 %v1128, %v1129
    %v1131 = vrot.slane %v1130, 1
    %v1132 = vadd.f32 %v1130, %v1131
    %v1133 = vmul.f32 %v973, %v61
    %v1134 = vmul.f32 %v974, %v61
    %v1135 = vmul.f32 %v975, %v61
    %v1136 = vmul.f32 %v976, %v61
    %v1137 = vmul.f32 %v977, %v61
    %v1138 = vmul.f32 %v978, %v61
    %v1139 = vmul.f32 %v979, %v61
    %v1140 = vmul.f32 %v980, %v61
    %v1141 = vmul.f32 %v981, %v70
    %v1142 = vmul.f32 %v982, %v70
    %v1143 = vmul.f32 %v983, %v70
    %v1144 = vmul.f32 %v984, %v70
    %v1145 = vmul.f32 %v985, %v70
    %v1146 = vmul.f32 %v986, %v70
    %v1147 = vmul.f32 %v987, %v70
    %v1148 = vmul.f32 %v988, %v70
    %v1149 = vsub.f32 %v1133, %v1141
    %v1150 = vsub.f32 %v1134, %v1142
    %v1151 = vsub.f32 %v1135, %v1143
    %v1152 = vsub.f32 %v1136, %v1144
    %v1153 = vsub.f32 %v1137, %v1145
    %v1154 = vsub.f32 %v1138, %v1146
    %v1155 = vsub.f32 %v1139, %v1147
    %v1156 = vsub.f32 %v1140, %v1148
    %v1157 = vrot.slane %v1149, 4
    %v1158 = vadd.f32 %v1149, %v1157
    %v1159 = vrot.slane %v1158, 2
    %v1160 = vadd.f32 %v1158, %v1159
    %v1161 = vrot.slane %v1160, 1
    %v1162 = vadd.f32 %v1160, %v1161
    %v1163 = vrot.slane %v1150, 4
    %v1164 = vadd.f32 %v1150, %v1163
    %v1165 = vrot.slane %v1164, 2
    %v1166 = vadd.f32 %v1164, %v1165
    %v1167 = vrot.slane %v1166, 1
    %v1168 = vadd.f32 %v1166, %v1167
    %v1169 = vrot.slane %v1151, 4
    %v1170 = vadd.f32 %v1151, %v1169
    %v1171 = vrot.slane %v1170, 2
    %v1172 = vadd.f32 %v1170, %v1171
    %v1173 = vrot.slane %v1172, 1
    %v1174 = vadd.f32 %v1172, %v1173
    %v1175 = vrot.slane %v1152, 4
    %v1176 = vadd.f32 %v1152, %v1175
    %v1177 = vrot.slane %v1176, 2
    %v1178 = vadd.f32 %v1176, %v1177
    %v1179 = vrot.slane %v1178, 1
    %v1180 = vadd.f32 %v1178, %v1179
    %v1181 = vrot.slane %v1153, 4
    %v1182 = vadd.f32 %v1153, %v1181
    %v1183 = vrot.slane %v1182, 2
    %v1184 = vadd.f32 %v1182, %v1183
    %v1185 = vrot.slane %v1184, 1
    %v1186 = vadd.f32 %v1184, %v1185
    %v1187 = vrot.slane %v1154, 4
    %v1188 = vadd.f32 %v1154, %v1187
    %v1189 = vrot.slane %v1188, 2
    %v1190 = vadd.f32 %v1188, %v1189
    %v1191 = vrot.slane %v1190, 1
    %v1192 = vadd.f32 %v1190, %v1191
    %v1193 = vrot.slane %v1155, 4
    %v1194 = vadd.f32 %v1155, %v1193
    %v1195 = vrot.slane %v1194, 2
    %v1196 = vadd.f32 %v1194, %v1195
    %v1197 = vrot.slane %v1196, 1
    %v1198 = vadd.f32 %v1196, %v1197
    %v1199 = vrot.slane %v1156, 4
    %v1200 = vadd.f32 %v1156, %v1199
    %v1201 = vrot.slane %v1200, 2
    %v1202 = vadd.f32 %v1200, %v1201
    %v1203 = vrot.slane %v1202, 1
    %v1204 = vadd.f32 %v1202, %v1203
    %v1205 = vmul.f32 %v973, %v70
    %v1206 = vmul.f32 %v974, %v70
    %v1207 = vmul.f32 %v975, %v70
    %v1208 = vmul.f32 %v976, %v70
    %v1209 = vmul.f32 %v977, %v70
    %v1210 = vmul.f32 %v978, %v70
    %v1211 = vmul.f32 %v979, %v70
    %v1212 = vmul.f32 %v980, %v70
    %v1213 = vmul.f32 %v981, %v61
    %v1214 = vmul.f32 %v982, %v61
    %v1215 = vmul.f32 %v983, %v61
    %v1216 = vmul.f32 %v984, %v61
    %v1217 = vmul.f32 %v985, %v61
    %v1218 = vmul.f32 %v986, %v61
    %v1219 = vmul.f32 %v987, %v61
    %v1220 = vmul.f32 %v988, %v61
    %v1221 = vadd.f32 %v1205, %v1213
    %v1222 = vadd.f32 %v1206, %v1214
    %v1223 = vadd.f32 %v1207, %v1215
    %v1224 = vadd.f32 %v1208, %v1216
    %v1225 = vadd.f32 %v1209, %v1217
    %v1226 = vadd.f32 %v1210, %v1218
    %v1227 = vadd.f32 %v1211, %v1219
    %v1228 = vadd.f32 %v1212, %v1220
    %v1229 = vrot.slane %v1221, 4
    %v1230 = vadd.f32 %v1221, %v1229
    %v1231 = vrot.slane %v1230, 2
    %v1232 = vadd.f32 %v1230, %v1231
    %v1233 = vrot.slane %v1232, 1
    %v1234 = vadd.f32 %v1232, %v1233
    %v1235 = vrot.slane %v1222, 4
    %v1236 = vadd.f32 %v1222, %v1235
    %v1237 = vrot.slane %v1236, 2
    %v1238 = vadd.f32 %v1236, %v1237
    %v1239 = vrot.slane %v1238, 1
    %v1240 = vadd.f32 %v1238, %v1239
    %v1241 = vrot.slane %v1223, 4
    %v1242 = vadd.f32 %v1223, %v1241
    %v1243 = vrot.slane %v1242, 2
    %v1244 = vadd.f32 %v1242, %v1243
    %v1245 = vrot.slane %v1244, 1
    %v1246 = vadd.f32 %v1244, %v1245
    %v1247 = vrot.slane %v1224, 4
    %v1248 = vadd.f32 %v1224, %v1247
    %v1249 = vrot.slane %v1248, 2
    %v1250 = vadd.f32 %v1248, %v1249
    %v1251 = vrot.slane %v1250, 1
    %v1252 = vadd.f32 %v1250, %v1251
    %v1253 = vrot.slane %v1225, 4
    %v1254 = vadd.f32 %v1225, %v1253
    %v1255 = vrot.slane %v1254, 2
    %v1256 = vadd.f32 %v1254, %v1255
    %v1257 = vrot.slane %v1256, 1
    %v1258 = vadd.f32 %v1256, %v1257
    %v1259 = vrot.slane %v1226, 4
    %v1260 = vadd.f32 %v1226, %v1259
    %v1261 = vrot.slane %v1260, 2
    %v1262 = vadd.f32 %v1260, %v1261
    %v1263 = vrot.slane %v1262, 1
    %v1264 = vadd.f32 %v1262, %v1263
    %v1265 = vrot.slane %v1227, 4
    %v1266 = vadd.f32 %v1227, %v1265
    %v1267 = vrot.slane %v1266, 2
    %v1268 = vadd.f32 %v1266, %v1267
    %v1269 = vrot.slane %v1268, 1
    %v1270 = vadd.f32 %v1268, %v1269
    %v1271 = vrot.slane %v1228, 4
    %v1272 = vadd.f32 %v1228, %v1271
    %v1273 = vrot.slane %v1272, 2
    %v1274 = vadd.f32 %v1272, %v1273
    %v1275 = vrot.slane %v1274, 1
    %v1276 = vadd.f32 %v1274, %v1275
    %v1277 = vmul.f32 %v973, %v62
    %v1278 = vmul.f32 %v974, %v62
    %v1279 = vmul.f32 %v975, %v62
    %v1280 = vmul.f32 %v976, %v62
    %v1281 = vmul.f32 %v977, %v62
    %v1282 = vmul.f32 %v978, %v62
    %v1283 = vmul.f32 %v979, %v62
    %v1284 = vmul.f32 %v980, %v62
    %v1285 = vmul.f32 %v981, %v71
    %v1286 = vmul.f32 %v982, %v71
    %v1287 = vmul.f32 %v983, %v71
    %v1288 = vmul.f32 %v984, %v71
    %v1289 = vmul.f32 %v985, %v71
    %v1290 = vmul.f32 %v986, %v71
    %v1291 = vmul.f32 %v987, %v71
    %v1292 = vmul.f32 %v988, %v71
    %v1293 = vsub.f32 %v1277, %v1285
    %v1294 = vsub.f32 %v1278, %v1286
    %v1295 = vsub.f32 %v1279, %v1287
    %v1296 = vsub.f32 %v1280, %v1288
    %v1297 = vsub.f32 %v1281, %v1289
    %v1298 = vsub.f32 %v1282, %v1290
    %v1299 = vsub.f32 %v1283, %v1291
    %v1300 = vsub.f32 %v1284, %v1292
    %v1301 = vrot.slane %v1293, 4
    %v1302 = vadd.f32 %v1293, %v1301
    %v1303 = vrot.slane %v1302, 2
    %v1304 = vadd.f32 %v1302, %v1303
    %v1305 = vrot.slane %v1304, 1
    %v1306 = vadd.f32 %v1304, %v1305
    %v1307 = vrot.slane %v1294, 4
    %v1308 = vadd.f32 %v1294, %v1307
    %v1309 = vrot.slane %v1308, 2
    %v1310 = vadd.f32 %v1308, %v1309
    %v1311 = vrot.slane %v1310, 1
    %v1312 = vadd.f32 %v1310, %v1311
    %v1313 = vrot.slane %v1295, 4
    %v1314 = vadd.f32 %v1295, %v1313
    %v1315 = vrot.slane %v1314, 2
    %v1316 = vadd.f32 %v1314, %v1315
    %v1317 = vrot.slane %v1316, 1
    %v1318 = vadd.f32 %v1316, %v1317
    %v1319 = vrot.slane %v1296, 4
    %v1320 = vadd.f32 %v1296, %v1319
    %v1321 = vrot.slane %v1320, 2
    %v1322 = vadd.f32 %v1320, %v1321
    %v1323 = vrot.slane %v1322, 1
    %v1324 = vadd.f32 %v1322, %v1323
    %v1325 = vrot.slane %v1297, 4
    %v1326 = vadd.f32 %v1297, %v1325
    %v1327 = vrot.slane %v1326, 2
    %v1328 = vadd.f32 %v1326, %v1327
    %v1329 = vrot.slane %v1328, 1
    %v1330 = vadd.f32 %v1328, %v1329
    %v1331 = vrot.slane %v1298, 4
    %v1332 = vadd.f32 %v1298, %v1331
    %v1333 = vrot.slane %v1332, 2
    %v1334 = vadd.f32 %v1332, %v1333
    %v1335 = vrot.slane %v1334, 1
    %v1336 = vadd.f32 %v1334, %v1335
    %v1337 = vrot.slane %v1299, 4
    %v1338 = vadd.f32 %v1299, %v1337
    %v1339 = vrot.slane %v1338, 2
    %v1340 = vadd.f32 %v1338, %v1339
    %v1341 = vrot.slane %v1340, 1
    %v1342 = vadd.f32 %v1340, %v1341
    %v1343 = vrot.slane %v1300, 4
    %v1344 = vadd.f32 %v1300, %v1343
    %v1345 = vrot.slane %v1344, 2
    %v1346 = vadd.f32 %v1344, %v1345
    %v1347 = vrot.slane %v1346, 1
    %v1348 = vadd.f32 %v1346, %v1347
    %v1349 = vmul.f32 %v973, %v71
    %v1350 = vmul.f32 %v974, %v71
    %v1351 = vmul.f32 %v975, %v71
    %v1352 = vmul.f32 %v976, %v71
    %v1353 = vmul.f32 %v977, %v71
    %v1354 = vmul.f32 %v978, %v71
    %v1355 = vmul.f32 %v979, %v71
    %v1356 = vmul.f32 %v980, %v71
    %v1357 = vmul.f32 %v981, %v62
    %v1358 = vmul.f32 %v982, %v62
    %v1359 = vmul.f32 %v983, %v62
    %v1360 = vmul.f32 %v984, %v62
    %v1361 = vmul.f32 %v985, %v62
    %v1362 = vmul.f32 %v986, %v62
    %v1363 = vmul.f32 %v987, %v62
    %v1364 = vmul.f32 %v988, %v62
    %v1365 = vadd.f32 %v1349, %v1357
    %v1366 = vadd.f32 %v1350, %v1358
    %v1367 = vadd.f32 %v1351, %v1359
    %v1368 = vadd.f32 %v1352, %v1360
    %v1369 = vadd.f32 %v1353, %v1361
    %v1370 = vadd.f32 %v1354, %v1362
    %v1371 = vadd.f32 %v1355, %v1363
    %v1372 = vadd.f32 %v1356, %v1364
    %v1373 = vrot.slane %v1365, 4
    %v1374 = vadd.f32 %v1365, %v1373
    %v1375 = vrot.slane %v1374, 2
    %v1376 = vadd.f32 %v1374, %v1375
    %v1377 = vrot.slane %v1376, 1
    %v1378 = vadd.f32 %v1376, %v1377
    %v1379 = vrot.slane %v1366, 4
    %v1380 = vadd.f32 %v1366, %v1379
    %v1381 = vrot.slane %v1380, 2
    %v1382 = vadd.f32 %v1380, %v1381
    %v1383 = vrot.slane %v1382, 1
    %v1384 = vadd.f32 %v1382, %v1383
    %v1385 = vrot.slane %v1367, 4
    %v1386 = vadd.f32 %v1367, %v1385
    %v1387 = vrot.slane %v1386, 2
    %v1388 = vadd.f32 %v1386, %v1387
    %v1389 = vrot.slane %v1388, 1
    %v1390 = vadd.f32 %v1388, %v1389
    %v1391 = vrot.slane %v1368, 4
    %v1392 = vadd.f32 %v1368, %v1391
    %v1393 = vrot.slane %v1392, 2
    %v1394 = vadd.f32 %v1392, %v1393
    %v1395 = vrot.slane %v1394, 1
    %v1396 = vadd.f32 %v1394, %v1395
    %v1397 = vrot.slane %v1369, 4
    %v1398 = vadd.f32 %v1369, %v1397
    %v1399 = vrot.slane %v1398, 2
    %v1400 = vadd.f32 %v1398, %v1399
    %v1401 = vrot.slane %v1400, 1
    %v1402 = vadd.f32 %v1400, %v1401
    %v1403 = vrot.slane %v1370, 4
    %v1404 = vadd.f32 %v1370, %v1403
    %v1405 = vrot.slane %v1404, 2
    %v1406 = vadd.f32 %v1404, %v1405
    %v1407 = vrot.slane %v1406, 1
    %v1408 = vadd.f32 %v1406, %v1407
    %v1409 = vrot.slane %v1371, 4
    %v1410 = vadd.f32 %v1371, %v1409
    %v1411 = vrot.slane %v1410, 2
    %v1412 = vadd.f32 %v1410, %v1411
    %v1413 = vrot.slane %v1412, 1
    %v1414 = vadd.f32 %v1412, %v1413
    %v1415 = vrot.slane %v1372, 4
    %v1416 = vadd.f32 %v1372, %v1415
    %v1417 = vrot.slane %v1416, 2
    %v1418 = vadd.f32 %v1416, %v1417
    %v1419 = vrot.slane %v1418, 1
    %v1420 = vadd.f32 %v1418, %v1419
    %v1421 = vmul.f32 %v973, %v63
    %v1422 = vmul.f32 %v974, %v63
    %v1423 = vmul.f32 %v975, %v63
    %v1424 = vmul.f32 %v976, %v63
    %v1425 = vmul.f32 %v977, %v63
    %v1426 = vmul.f32 %v978, %v63
    %v1427 = vmul.f32 %v979, %v63
    %v1428 = vmul.f32 %v980, %v63
    %v1429 = vmul.f32 %v981, %v72
    %v1430 = vmul.f32 %v982, %v72
    %v1431 = vmul.f32 %v983, %v72
    %v1432 = vmul.f32 %v984, %v72
    %v1433 = vmul.f32 %v985, %v72
    %v1434 = vmul.f32 %v986, %v72
    %v1435 = vmul.f32 %v987, %v72
    %v1436 = vmul.f32 %v988, %v72
    %v1437 = vsub.f32 %v1421, %v1429
    %v1438 = vsub.f32 %v1422, %v1430
    %v1439 = vsub.f32 %v1423, %v1431
    %v1440 = vsub.f32 %v1424, %v1432
    %v1441 = vsub.f32 %v1425, %v1433
    %v1442 = vsub.f32 %v1426, %v1434
    %v1443 = vsub.f32 %v1427, %v1435
    %v1444 = vsub.f32 %v1428, %v1436
    %v1445 = vrot.slane %v1437, 4
    %v1446 = vadd.f32 %v1437, %v1445
    %v1447 = vrot.slane %v1446, 2
    %v1448 = vadd.f32 %v1446, %v1447
    %v1449 = vrot.slane %v1448, 1
    %v1450 = vadd.f32 %v1448, %v1449
    %v1451 = vrot.slane %v1438, 4
    %v1452 = vadd.f32 %v1438, %v1451
    %v1453 = vrot.slane %v1452, 2
    %v1454 = vadd.f32 %v1452, %v1453
    %v1455 = vrot.slane %v1454, 1
    %v1456 = vadd.f32 %v1454, %v1455
    %v1457 = vrot.slane %v1439, 4
    %v1458 = vadd.f32 %v1439, %v1457
    %v1459 = vrot.slane %v1458, 2
    %v1460 = vadd.f32 %v1458, %v1459
    %v1461 = vrot.slane %v1460, 1
    %v1462 = vadd.f32 %v1460, %v1461
    %v1463 = vrot.slane %v1440, 4
    %v1464 = vadd.f32 %v1440, %v1463
    %v1465 = vrot.slane %v1464, 2
    %v1466 = vadd.f32 %v1464, %v1465
    %v1467 = vrot.slane %v1466, 1
    %v1468 = vadd.f32 %v1466, %v1467
    %v1469 = vrot.slane %v1441, 4
    %v1470 = vadd.f32 %v1441, %v1469
    %v1471 = vrot.slane %v1470, 2
    %v1472 = vadd.f32 %v1470, %v1471
    %v1473 = vrot.slane %v1472, 1
    %v1474 = vadd.f32 %v1472, %v1473
    %v1475 = vrot.slane %v1442, 4
    %v1476 = vadd.f32 %v1442, %v1475
    %v1477 = vrot.slane %v1476, 2
    %v1478 = vadd.f32 %v1476, %v1477
    %v1479 = vrot.slane %v1478, 1
    %v1480 = vadd.f32 %v1478, %v1479
    %v1481 = vrot.slane %v1443, 4
    %v1482 = vadd.f32 %v1443, %v1481
    %v1483 = vrot.slane %v1482, 2
    %v1484 = vadd.f32 %v1482, %v1483
    %v1485 = vrot.slane %v1484, 1
    %v1486 = vadd.f32 %v1484, %v1485
    %v1487 = vrot.slane %v1444, 4
    %v1488 = vadd.f32 %v1444, %v1487
    %v1489 = vrot.slane %v1488, 2
    %v1490 = vadd.f32 %v1488, %v1489
    %v1491 = vrot.slane %v1490, 1
    %v1492 = vadd.f32 %v1490, %v1491
    %v1493 = vmul.f32 %v973, %v72
    %v1494 = vmul.f32 %v974, %v72
    %v1495 = vmul.f32 %v975, %v72
    %v1496 = vmul.f32 %v976, %v72
    %v1497 = vmul.f32 %v977, %v72
    %v1498 = vmul.f32 %v978, %v72
    %v1499 = vmul.f32 %v979, %v72
    %v1500 = vmul.f32 %v980, %v72
    %v1501 = vmul.f32 %v981, %v63
    %v1502 = vmul.f32 %v982, %v63
    %v1503 = vmul.f32 %v983, %v63
    %v1504 = vmul.f32 %v984, %v63
    %v1505 = vmul.f32 %v985, %v63
    %v1506 = vmul.f32 %v986, %v63
    %v1507 = vmul.f32 %v987, %v63
    %v1508 = vmul.f32 %v988, %v63
    %v1509 = vadd.f32 %v1493, %v1501
    %v1510 = vadd.f32 %v1494, %v1502
    %v1511 = vadd.f32 %v1495, %v1503
    %v1512 = vadd.f32 %v1496, %v1504
    %v1513 = vadd.f32 %v1497, %v1505
    %v1514 = vadd.f32 %v1498, %v1506
    %v1515 = vadd.f32 %v1499, %v1507
    %v1516 = vadd.f32 %v1500, %v1508
    %v1517 = vrot.slane %v1509, 4
    %v1518 = vadd.f32 %v1509, %v1517
    %v1519 = vrot.slane %v1518, 2
    %v1520 = vadd.f32 %v1518, %v1519
    %v1521 = vrot.slane %v1520, 1
    %v1522 = vadd.f32 %v1520, %v1521
    %v1523 = vrot.slane %v1510, 4
    %v1524 = vadd.f32 %v1510, %v1523
    %v1525 = vrot.slane %v1524, 2
    %v1526 = vadd.f32 %v1524, %v1525
    %v1527 = vrot.slane %v1526, 1
    %v1528 = vadd.f32 %v1526, %v1527
    %v1529 = vrot.slane %v1511, 4
    %v1530 = vadd.f32 %v1511, %v1529
    %v1531 = vrot.slane %v1530, 2
    %v1532 = vadd.f32 %v1530, %v1531
    %v1533 = vrot.slane %v1532, 1
    %v1534 = vadd.f32 %v1532, %v1533
    %v1535 = vrot.slane %v1512, 4
    %v1536 = vadd.f32 %v1512, %v1535
    %v1537 = vrot.slane %v1536, 2
    %v1538 = vadd.f32 %v1536, %v1537
    %v1539 = vrot.slane %v1538, 1
    %v1540 = vadd.f32 %v1538, %v1539
    %v1541 = vrot.slane %v1513, 4
    %v1542 = vadd.f32 %v1513, %v1541
    %v1543 = vrot.slane %v1542, 2
    %v1544 = vadd.f32 %v1542, %v1543
    %v1545 = vrot.slane %v1544, 1
    %v1546 = vadd.f32 %v1544, %v1545
    %v1547 = vrot.slane %v1514, 4
    %v1548 = vadd.f32 %v1514, %v1547
    %v1549 = vrot.slane %v1548, 2
    %v1550 = vadd.f32 %v1548, %v1549
    %v1551 = vrot.slane %v1550, 1
    %v1552 = vadd.f32 %v1550, %v1551
    %v1553 = vrot.slane %v1515, 4
    %v1554 = vadd.f32 %v1515, %v1553
    %v1555 = vrot.slane %v1554, 2
    %v1556 = vadd.f32 %v1554, %v1555
    %v1557 = vrot.slane %v1556, 1
    %v1558 = vadd.f32 %v1556, %v1557
    %v1559 = vrot.slane %v1516, 4
    %v1560 = vadd.f32 %v1516, %v1559
    %v1561 = vrot.slane %v1560, 2
    %v1562 = vadd.f32 %v1560, %v1561
    %v1563 = vrot.slane %v1562, 1
    %v1564 = vadd.f32 %v1562, %v1563
    %v1565 = vmul.f32 %v973, %v64
    %v1566 = vmul.f32 %v974, %v64
    %v1567 = vmul.f32 %v975, %v64
    %v1568 = vmul.f32 %v976, %v64
    %v1569 = vmul.f32 %v977, %v64
    %v1570 = vmul.f32 %v978, %v64
    %v1571 = vmul.f32 %v979, %v64
    %v1572 = vmul.f32 %v980, %v64
    %v1573 = vmul.f32 %v981, %v73
    %v1574 = vmul.f32 %v982, %v73
    %v1575 = vmul.f32 %v983, %v73
    %v1576 = vmul.f32 %v984, %v73
    %v1577 = vmul.f32 %v985, %v73
    %v1578 = vmul.f32 %v986, %v73
    %v1579 = vmul.f32 %v987, %v73
    %v1580 = vmul.f32 %v988, %v73
    %v1581 = vsub.f32 %v1565, %v1573
    %v1582 = vsub.f32 %v1566, %v1574
    %v1583 = vsub.f32 %v1567, %v1575
    %v1584 = vsub.f32 %v1568, %v1576
    %v1585 = vsub.f32 %v1569, %v1577
    %v1586 = vsub.f32 %v1570, %v1578
    %v1587 = vsub.f32 %v1571, %v1579
    %v1588 = vsub.f32 %v1572, %v1580
    %v1589 = vrot.slane %v1581, 4
    %v1590 = vadd.f32 %v1581, %v1589
    %v1591 = vrot.slane %v1590, 2
    %v1592 = vadd.f32 %v1590, %v1591
    %v1593 = vrot.slane %v1592, 1
    %v1594 = vadd.f32 %v1592, %v1593
    %v1595 = vrot.slane %v1582, 4
    %v1596 = vadd.f32 %v1582, %v1595
    %v1597 = vrot.slane %v1596, 2
    %v1598 = vadd.f32 %v1596, %v1597
    %v1599 = vrot.slane %v1598, 1
    %v1600 = vadd.f32 %v1598, %v1599
    %v1601 = vrot.slane %v1583, 4
    %v1602 = vadd.f32 %v1583, %v1601
    %v1603 = vrot.slane %v1602, 2
    %v1604 = vadd.f32 %v1602, %v1603
    %v1605 = vrot.slane %v1604, 1
    %v1606 = vadd.f32 %v1604, %v1605
    %v1607 = vrot.slane %v1584, 4
    %v1608 = vadd.f32 %v1584, %v1607
    %v1609 = vrot.slane %v1608, 2
    %v1610 = vadd.f32 %v1608, %v1609
    %v1611 = vrot.slane %v1610, 1
    %v1612 = vadd.f32 %v1610, %v1611
    %v1613 = vrot.slane %v1585, 4
    %v1614 = vadd.f32 %v1585, %v1613
    %v1615 = vrot.slane %v1614, 2
    %v1616 = vadd.f32 %v1614, %v1615
    %v1617 = vrot.slane %v1616, 1
    %v1618 = vadd.f32 %v1616, %v1617
    %v1619 = vrot.slane %v1586, 4
    %v1620 = vadd.f32 %v1586, %v1619
    %v1621 = vrot.slane %v1620, 2
    %v1622 = vadd.f32 %v1620, %v1621
    %v1623 = vrot.slane %v1622, 1
    %v1624 = vadd.f32 %v1622, %v1623
    %v1625 = vrot.slane %v1587, 4
    %v1626 = vadd.f32 %v1587, %v1625
    %v1627 = vrot.slane %v1626, 2
    %v1628 = vadd.f32 %v1626, %v1627
    %v1629 = vrot.slane %v1628, 1
    %v1630 = vadd.f32 %v1628, %v1629
    %v1631 = vrot.slane %v1588, 4
    %v1632 = vadd.f32 %v1588, %v1631
    %v1633 = vrot.slane %v1632, 2
    %v1634 = vadd.f32 %v1632, %v1633
    %v1635 = vrot.slane %v1634, 1
    %v1636 = vadd.f32 %v1634, %v1635
    %v1637 = vmul.f32 %v973, %v73
    %v1638 = vmul.f32 %v974, %v73
    %v1639 = vmul.f32 %v975, %v73
    %v1640 = vmul.f32 %v976, %v73
    %v1641 = vmul.f32 %v977, %v73
    %v1642 = vmul.f32 %v978, %v73
    %v1643 = vmul.f32 %v979, %v73
    %v1644 = vmul.f32 %v980, %v73
    %v1645 = vmul.f32 %v981, %v64
    %v1646 = vmul.f32 %v982, %v64
    %v1647 = vmul.f32 %v983, %v64
    %v1648 = vmul.f32 %v984, %v64
    %v1649 = vmul.f32 %v985, %v64
    %v1650 = vmul.f32 %v986, %v64
    %v1651 = vmul.f32 %v987, %v64
    %v1652 = vmul.f32 %v988, %v64
    %v1653 = vadd.f32 %v1637, %v1645
    %v1654 = vadd.f32 %v1638, %v1646
    %v1655 = vadd.f32 %v1639, %v1647
    %v1656 = vadd.f32 %v1640, %v1648
    %v1657 = vadd.f32 %v1641, %v1649
    %v1658 = vadd.f32 %v1642, %v1650
    %v1659 = vadd.f32 %v1643, %v1651
    %v1660 = vadd.f32 %v1644, %v1652
    %v1661 = vrot.slane %v1653, 4
    %v1662 = vadd.f32 %v1653, %v1661
    %v1663 = vrot.slane %v1662, 2
    %v1664 = vadd.f32 %v1662, %v1663
    %v1665 = vrot.slane %v1664, 1
    %v1666 = vadd.f32 %v1664, %v1665
    %v1667 = vrot.slane %v1654, 4
    %v1668 = vadd.f32 %v1654, %v1667
    %v1669 = vrot.slane %v1668, 2
    %v1670 = vadd.f32 %v1668, %v1669
    %v1671 = vrot.slane %v1670, 1
    %v1672 = vadd.f32 %v1670, %v1671
    %v1673 = vrot.slane %v1655, 4
    %v1674 = vadd.f32 %v1655, %v1673
    %v1675 = vrot.slane %v1674, 2
    %v1676 = vadd.f32 %v1674, %v1675
    %v1677 = vrot.slane %v1676, 1
    %v1678 = vadd.f32 %v1676, %v1677
    %v1679 = vrot.slane %v1656, 4
    %v1680 = vadd.f32 %v1656, %v1679
    %v1681 = vrot.slane %v1680, 2
    %v1682 = vadd.f32 %v1680, %v1681
    %v1683 = vrot.slane %v1682, 1
    %v1684 = vadd.f32 %v1682, %v1683
    %v1685 = vrot.slane %v1657, 4
    %v1686 = vadd.f32 %v1657, %v1685
    %v1687 = vrot.slane %v1686, 2
    %v1688 = vadd.f32 %v1686, %v1687
    %v1689 = vrot.slane %v1688, 1
    %v1690 = vadd.f32 %v1688, %v1689
    %v1691 = vrot.slane %v1658, 4
    %v1692 = vadd.f32 %v1658, %v1691
    %v1693 = vrot.slane %v1692, 2
    %v1694 = vadd.f32 %v1692, %v1693
    %v1695 = vrot.slane %v1694, 1
    %v1696 = vadd.f32 %v1694, %v1695
    %v1697 = vrot.slane %v1659, 4
    %v1698 = vadd.f32 %v1659, %v1697
    %v1699 = vrot.slane %v1698, 2
    %v1700 = vadd.f32 %v1698, %v1699
    %v1701 = vrot.slane %v1700, 1
    %v1702 = vadd.f32 %v1700, %v1701
    %v1703 = vrot.slane %v1660, 4
    %v1704 = vadd.f32 %v1660, %v1703
    %v1705 = vrot.slane %v1704, 2
    %v1706 = vadd.f32 %v1704, %v1705
    %v1707 = vrot.slane %v1706, 1
    %v1708 = vadd.f32 %v1706, %v1707
    %v1709 = vmul.f32 %v973, %v65
    %v1710 = vmul.f32 %v974, %v65
    %v1711 = vmul.f32 %v975, %v65
    %v1712 = vmul.f32 %v976, %v65
    %v1713 = vmul.f32 %v977, %v65
    %v1714 = vmul.f32 %v978, %v65
    %v1715 = vmul.f32 %v979, %v65
    %v1716 = vmul.f32 %v980, %v65
    %v1717 = vmul.f32 %v981, %v74
    %v1718 = vmul.f32 %v982, %v74
    %v1719 = vmul.f32 %v983, %v74
    %v1720 = vmul.f32 %v984, %v74
    %v1721 = vmul.f32 %v985, %v74
    %v1722 = vmul.f32 %v986, %v74
    %v1723 = vmul.f32 %v987, %v74
    %v1724 = vmul.f32 %v988, %v74
    %v1725 = vsub.f32 %v1709, %v1717
    %v1726 = vsub.f32 %v1710, %v1718
    %v1727 = vsub.f32 %v1711, %v1719
    %v1728 = vsub.f32 %v1712, %v1720
    %v1729 = vsub.f32 %v1713, %v1721
    %v1730 = vsub.f32 %v1714, %v1722
    %v1731 = vsub.f32 %v1715, %v1723
    %v1732 = vsub.f32 %v1716, %v1724
    %v1733 = vrot.slane %v1725, 4
    %v1734 = vadd.f32 %v1725, %v1733
    %v1735 = vrot.slane %v1734, 2
    %v1736 = vadd.f32 %v1734, %v1735
    %v1737 = vrot.slane %v1736, 1
    %v1738 = vadd.f32 %v1736, %v1737
    %v1739 = vrot.slane %v1726, 4
    %v1740 = vadd.f32 %v1726, %v1739
    %v1741 = vrot.slane %v1740, 2
    %v1742 = vadd.f32 %v1740, %v1741
    %v1743 = vrot.slane %v1742, 1
    %v1744 = vadd.f32 %v1742, %v1743
    %v1745 = vrot.slane %v1727, 4
    %v1746 = vadd.f32 %v1727, %v1745
    %v1747 = vrot.slane %v1746, 2
    %v1748 = vadd.f32 %v1746, %v1747
    %v1749 = vrot.slane %v1748, 1
    %v1750 = vadd.f32 %v1748, %v1749
    %v1751 = vrot.slane %v1728, 4
    %v1752 = vadd.f32 %v1728, %v1751
    %v1753 = vrot.slane %v1752, 2
    %v1754 = vadd.f32 %v1752, %v1753
    %v1755 = vrot.slane %v1754, 1
    %v1756 = vadd.f32 %v1754, %v1755
    %v1757 = vrot.slane %v1729, 4
    %v1758 = vadd.f32 %v1729, %v1757
    %v1759 = vrot.slane %v1758, 2
    %v1760 = vadd.f32 %v1758, %v1759
    %v1761 = vrot.slane %v1760, 1
    %v1762 = vadd.f32 %v1760, %v1761
    %v1763 = vrot.slane %v1730, 4
    %v1764 = vadd.f32 %v1730, %v1763
    %v1765 = vrot.slane %v1764, 2
    %v1766 = vadd.f32 %v1764, %v1765
    %v1767 = vrot.slane %v1766, 1
    %v1768 = vadd.f32 %v1766, %v1767
    %v1769 = vrot.slane %v1731, 4
    %v1770 = vadd.f32 %v1731, %v1769
    %v1771 = vrot.slane %v1770, 2
    %v1772 = vadd.f32 %v1770, %v1771
    %v1773 = vrot.slane %v1772, 1
    %v1774 = vadd.f32 %v1772, %v1773
    %v1775 = vrot.slane %v1732, 4
    %v1776 = vadd.f32 %v1732, %v1775
    %v1777 = vrot.slane %v1776, 2
    %v1778 = vadd.f32 %v1776, %v1777
    %v1779 = vrot.slane %v1778, 1
    %v1780 = vadd.f32 %v1778, %v1779
    %v1781 = vmul.f32 %v973, %v74
    %v1782 = vmul.f32 %v974, %v74
    %v1783 = vmul.f32 %v975, %v74
    %v1784 = vmul.f32 %v976, %v74
    %v1785 = vmul.f32 %v977, %v74
    %v1786 = vmul.f32 %v978, %v74
    %v1787 = vmul.f32 %v979, %v74
    %v1788 = vmul.f32 %v980, %v74
    %v1789 = vmul.f32 %v981, %v65
    %v1790 = vmul.f32 %v982, %v65
    %v1791 = vmul.f32 %v983, %v65
    %v1792 = vmul.f32 %v984, %v65
    %v1793 = vmul.f32 %v985, %v65
    %v1794 = vmul.f32 %v986, %v65
    %v1795 = vmul.f32 %v987, %v65
    %v1796 = vmul.f32 %v988, %v65
    %v1797 = vadd.f32 %v1781, %v1789
    %v1798 = vadd.f32 %v1782, %v1790
    %v1799 = vadd.f32 %v1783, %v1791
    %v1800 = vadd.f32 %v1784, %v1792
    %v1801 = vadd.f32 %v1785, %v1793
    %v1802 = vadd.f32 %v1786, %v1794
    %v1803 = vadd.f32 %v1787, %v1795
    %v1804 = vadd.f32 %v1788, %v1796
    %v1805 = vrot.slane %v1797, 4
    %v1806 = vadd.f32 %v1797, %v1805
    %v1807 = vrot.slane %v1806, 2
    %v1808 = vadd.f32 %v1806, %v1807
    %v1809 = vrot.slane %v1808, 1
    %v1810 = vadd.f32 %v1808, %v1809
    %v1811 = vrot.slane %v1798, 4
    %v1812 = vadd.f32 %v1798, %v1811
    %v1813 = vrot.slane %v1812, 2
    %v1814 = vadd.f32 %v1812, %v1813
    %v1815 = vrot.slane %v1814, 1
    %v1816 = vadd.f32 %v1814, %v1815
    %v1817 = vrot.slane %v1799, 4
    %v1818 = vadd.f32 %v1799, %v1817
    %v1819 = vrot.slane %v1818, 2
    %v1820 = vadd.f32 %v1818, %v1819
    %v1821 = vrot.slane %v1820, 1
    %v1822 = vadd.f32 %v1820, %v1821
    %v1823 = vrot.slane %v1800, 4
    %v1824 = vadd.f32 %v1800, %v1823
    %v1825 = vrot.slane %v1824, 2
    %v1826 = vadd.f32 %v1824, %v1825
    %v1827 = vrot.slane %v1826, 1
    %v1828 = vadd.f32 %v1826, %v1827
    %v1829 = vrot.slane %v1801, 4
    %v1830 = vadd.f32 %v1801, %v1829
    %v1831 = vrot.slane %v1830, 2
    %v1832 = vadd.f32 %v1830, %v1831
    %v1833 = vrot.slane %v1832, 1
    %v1834 = vadd.f32 %v1832, %v1833
    %v1835 = vrot.slane %v1802, 4
    %v1836 = vadd.f32 %v1802, %v1835
    %v1837 = vrot.slane %v1836, 2
    %v1838 = vadd.f32 %v1836, %v1837
    %v1839 = vrot.slane %v1838, 1
    %v1840 = vadd.f32 %v1838, %v1839
    %v1841 = vrot.slane %v1803, 4
    %v1842 = vadd.f32 %v1803, %v1841
    %v1843 = vrot.slane %v1842, 2
    %v1844 = vadd.f32 %v1842, %v1843
    %v1845 = vrot.slane %v1844, 1
    %v1846 = vadd.f32 %v1844, %v1845
    %v1847 = vrot.slane %v1804, 4
    %v1848 = vadd.f32 %v1804, %v1847
    %v1849 = vrot.slane %v1848, 2
    %v1850 = vadd.f32 %v1848, %v1849
    %v1851 = vrot.slane %v1850, 1
    %v1852 = vadd.f32 %v1850, %v1851
    %v1853 = vmul.f32 %v973, %v66
    %v1854 = vmul.f32 %v974, %v66
    %v1855 = vmul.f32 %v975, %v66
    %v1856 = vmul.f32 %v976, %v66
    %v1857 = vmul.f32 %v977, %v66
    %v1858 = vmul.f32 %v978, %v66
    %v1859 = vmul.f32 %v979, %v66
    %v1860 = vmul.f32 %v980, %v66
    %v1861 = vmul.f32 %v981, %v75
    %v1862 = vmul.f32 %v982, %v75
    %v1863 = vmul.f32 %v983, %v75
    %v1864 = vmul.f32 %v984, %v75
    %v1865 = vmul.f32 %v985, %v75
    %v1866 = vmul.f32 %v986, %v75
    %v1867 = vmul.f32 %v987, %v75
    %v1868 = vmul.f32 %v988, %v75
    %v1869 = vsub.f32 %v1853, %v1861
    %v1870 = vsub.f32 %v1854, %v1862
    %v1871 = vsub.f32 %v1855, %v1863
    %v1872 = vsub.f32 %v1856, %v1864
    %v1873 = vsub.f32 %v1857, %v1865
    %v1874 = vsub.f32 %v1858, %v1866
    %v1875 = vsub.f32 %v1859, %v1867
    %v1876 = vsub.f32 %v1860, %v1868
    %v1877 = vrot.slane %v1869, 4
    %v1878 = vadd.f32 %v1869, %v1877
    %v1879 = vrot.slane %v1878, 2
    %v1880 = vadd.f32 %v1878, %v1879
    %v1881 = vrot.slane %v1880, 1
    %v1882 = vadd.f32 %v1880, %v1881
    %v1883 = vrot.slane %v1870, 4
    %v1884 = vadd.f32 %v1870, %v1883
    %v1885 = vrot.slane %v1884, 2
    %v1886 = vadd.f32 %v1884, %v1885
    %v1887 = vrot.slane %v1886, 1
    %v1888 = vadd.f32 %v1886, %v1887
    %v1889 = vrot.slane %v1871, 4
    %v1890 = vadd.f32 %v1871, %v1889
    %v1891 = vrot.slane %v1890, 2
    %v1892 = vadd.f32 %v1890, %v1891
    %v1893 = vrot.slane %v1892, 1
    %v1894 = vadd.f32 %v1892, %v1893
    %v1895 = vrot.slane %v1872, 4
    %v1896 = vadd.f32 %v1872, %v1895
    %v1897 = vrot.slane %v1896, 2
    %v1898 = vadd.f32 %v1896, %v1897
    %v1899 = vrot.slane %v1898, 1
    %v1900 = vadd.f32 %v1898, %v1899
    %v1901 = vrot.slane %v1873, 4
    %v1902 = vadd.f32 %v1873, %v1901
    %v1903 = vrot.slane %v1902, 2
    %v1904 = vadd.f32 %v1902, %v1903
    %v1905 = vrot.slane %v1904, 1
    %v1906 = vadd.f32 %v1904, %v1905
    %v1907 = vrot.slane %v1874, 4
    %v1908 = vadd.f32 %v1874, %v1907
    %v1909 = vrot.slane %v1908, 2
    %v1910 = vadd.f32 %v1908, %v1909
    %v1911 = vrot.slane %v1910, 1
    %v1912 = vadd.f32 %v1910, %v1911
    %v1913 = vrot.slane %v1875, 4
    %v1914 = vadd.f32 %v1875, %v1913
    %v1915 = vrot.slane %v1914, 2
    %v1916 = vadd.f32 %v1914, %v1915
    %v1917 = vrot.slane %v1916, 1
    %v1918 = vadd.f32 %v1916, %v1917
    %v1919 = vrot.slane %v1876, 4
    %v1920 = vadd.f32 %v1876, %v1919
    %v1921 = vrot.slane %v1920, 2
    %v1922 = vadd.f32 %v1920, %v1921
    %v1923 = vrot.slane %v1922, 1
    %v1924 = vadd.f32 %v1922, %v1923
    %v1925 = vmul.f32 %v973, %v75
    %v1926 = vmul.f32 %v974, %v75
    %v1927 = vmul.f32 %v975, %v75
    %v1928 = vmul.f32 %v976, %v75
    %v1929 = vmul.f32 %v977, %v75
    %v1930 = vmul.f32 %v978, %v75
    %v1931 = vmul.f32 %v979, %v75
    %v1932 = vmul.f32 %v980, %v75
    %v1933 = vmul.f32 %v981, %v66
    %v1934 = vmul.f32 %v982, %v66
    %v1935 = vmul.f32 %v983, %v66
    %v1936 = vmul.f32 %v984, %v66
    %v1937 = vmul.f32 %v985, %v66
    %v1938 = vmul.f32 %v986, %v66
    %v1939 = vmul.f32 %v987, %v66
    %v1940 = vmul.f32 %v988, %v66
    %v1941 = vadd.f32 %v1925, %v1933
    %v1942 = vadd.f32 %v1926, %v1934
    %v1943 = vadd.f32 %v1927, %v1935
    %v1944 = vadd.f32 %v1928, %v1936
    %v1945 = vadd.f32 %v1929, %v1937
    %v1946 = vadd.f32 %v1930, %v1938
    %v1947 = vadd.f32 %v1931, %v1939
    %v1948 = vadd.f32 %v1932, %v1940
    %v1949 = vrot.slane %v1941, 4
    %v1950 = vadd.f32 %v1941, %v1949
    %v1951 = vrot.slane %v1950, 2
    %v1952 = vadd.f32 %v1950, %v1951
    %v1953 = vrot.slane %v1952, 1
    %v1954 = vadd.f32 %v1952, %v1953
    %v1955 = vrot.slane %v1942, 4
    %v1956 = vadd.f32 %v1942, %v1955
    %v1957 = vrot.slane %v1956, 2
    %v1958 = vadd.f32 %v1956, %v1957
    %v1959 = vrot.slane %v1958, 1
    %v1960 = vadd.f32 %v1958, %v1959
    %v1961 = vrot.slane %v1943, 4
    %v1962 = vadd.f32 %v1943, %v1961
    %v1963 = vrot.slane %v1962, 2
    %v1964 = vadd.f32 %v1962, %v1963
    %v1965 = vrot.slane %v1964, 1
    %v1966 = vadd.f32 %v1964, %v1965
    %v1967 = vrot.slane %v1944, 4
    %v1968 = vadd.f32 %v1944, %v1967
    %v1969 = vrot.slane %v1968, 2
    %v1970 = vadd.f32 %v1968, %v1969
    %v1971 = vrot.slane %v1970, 1
    %v1972 = vadd.f32 %v1970, %v1971
    %v1973 = vrot.slane %v1945, 4
    %v1974 = vadd.f32 %v1945, %v1973
    %v1975 = vrot.slane %v1974, 2
    %v1976 = vadd.f32 %v1974, %v1975
    %v1977 = vrot.slane %v1976, 1
    %v1978 = vadd.f32 %v1976, %v1977
    %v1979 = vrot.slane %v1946, 4
    %v1980 = vadd.f32 %v1946, %v1979
    %v1981 = vrot.slane %v1980, 2
    %v1982 = vadd.f32 %v1980, %v1981
    %v1983 = vrot.slane %v1982, 1
    %v1984 = vadd.f32 %v1982, %v1983
    %v1985 = vrot.slane %v1947, 4
    %v1986 = vadd.f32 %v1947, %v1985
    %v1987 = vrot.slane %v1986, 2
    %v1988 = vadd.f32 %v1986, %v1987
    %v1989 = vrot.slane %v1988, 1
    %v1990 = vadd.f32 %v1988, %v1989
    %v1991 = vrot.slane %v1948, 4
    %v1992 = vadd.f32 %v1948, %v1991
    %v1993 = vrot.slane %v1992, 2
    %v1994 = vadd.f32 %v1992, %v1993
    %v1995 = vrot.slane %v1994, 1
    %v1996 = vadd.f32 %v1994, %v1995
    %v1997 = vmul.f32 %v973, %v67
    %v1998 = vmul.f32 %v974, %v67
    %v1999 = vmul.f32 %v975, %v67
    %v2000 = vmul.f32 %v976, %v67
    %v2001 = vmul.f32 %v977, %v67
    %v2002 = vmul.f32 %v978, %v67
    %v2003 = vmul.f32 %v979, %v67
    %v2004 = vmul.f32 %v980, %v67
    %v2005 = vmul.f32 %v981, %v76
    %v2006 = vmul.f32 %v982, %v76
    %v2007 = vmul.f32 %v983, %v76
    %v2008 = vmul.f32 %v984, %v76
    %v2009 = vmul.f32 %v985, %v76
    %v2010 = vmul.f32 %v986, %v76
    %v2011 = vmul.f32 %v987, %v76
    %v2012 = vmul.f32 %v988, %v76
    %v2013 = vsub.f32 %v1997, %v2005
    %v2014 = vsub.f32 %v1998, %v2006
    %v2015 = vsub.f32 %v1999, %v2007
    %v2016 = vsub.f32 %v2000, %v2008
    %v2017 = vsub.f32 %v2001, %v2009
    %v2018 = vsub.f32 %v2002, %v2010
    %v2019 = vsub.f32 %v2003, %v2011
    %v2020 = vsub.f32 %v2004, %v2012
    %v2021 = vrot.slane %v2013, 4
    %v2022 = vadd.f32 %v2013, %v2021
    %v2023 = vrot.slane %v2022, 2
    %v2024 = vadd.f32 %v2022, %v2023
    %v2025 = vrot.slane %v2024, 1
    %v2026 = vadd.f32 %v2024, %v2025
    %v2027 = vrot.slane %v2014, 4
    %v2028 = vadd.f32 %v2014, %v2027
    %v2029 = vrot.slane %v2028, 2
    %v2030 = vadd.f32 %v2028, %v2029
    %v2031 = vrot.slane %v2030, 1
    %v2032 = vadd.f32 %v2030, %v2031
    %v2033 = vrot.slane %v2015, 4
    %v2034 = vadd.f32 %v2015, %v2033
    %v2035 = vrot.slane %v2034, 2
    %v2036 = vadd.f32 %v2034, %v2035
    %v2037 = vrot.slane %v2036, 1
    %v2038 = vadd.f32 %v2036, %v2037
    %v2039 = vrot.slane %v2016, 4
    %v2040 = vadd.f32 %v2016, %v2039
    %v2041 = vrot.slane %v2040, 2
    %v2042 = vadd.f32 %v2040, %v2041
    %v2043 = vrot.slane %v2042, 1
    %v2044 = vadd.f32 %v2042, %v2043
    %v2045 = vrot.slane %v2017, 4
    %v2046 = vadd.f32 %v2017, %v2045
    %v2047 = vrot.slane %v2046, 2
    %v2048 = vadd.f32 %v2046, %v2047
    %v2049 = vrot.slane %v2048, 1
    %v2050 = vadd.f32 %v2048, %v2049
    %v2051 = vrot.slane %v2018, 4
    %v2052 = vadd.f32 %v2018, %v2051
    %v2053 = vrot.slane %v2052, 2
    %v2054 = vadd.f32 %v2052, %v2053
    %v2055 = vrot.slane %v2054, 1
    %v2056 = vadd.f32 %v2054, %v2055
    %v2057 = vrot.slane %v2019, 4
    %v2058 = vadd.f32 %v2019, %v2057
    %v2059 = vrot.slane %v2058, 2
    %v2060 = vadd.f32 %v2058, %v2059
    %v2061 = vrot.slane %v2060, 1
    %v2062 = vadd.f32 %v2060, %v2061
    %v2063 = vrot.slane %v2020, 4
    %v2064 = vadd.f32 %v2020, %v2063
    %v2065 = vrot.slane %v2064, 2
    %v2066 = vadd.f32 %v2064, %v2065
    %v2067 = vrot.slane %v2066, 1
    %v2068 = vadd.f32 %v2066, %v2067
    %v2069 = vmul.f32 %v973, %v76
    %v2070 = vmul.f32 %v974, %v76
    %v2071 = vmul.f32 %v975, %v76
    %v2072 = vmul.f32 %v976, %v76
    %v2073 = vmul.f32 %v977, %v76
    %v2074 = vmul.f32 %v978, %v76
    %v2075 = vmul.f32 %v979, %v76
    %v2076 = vmul.f32 %v980, %v76
    %v2077 = vmul.f32 %v981, %v67
    %v2078 = vmul.f32 %v982, %v67
    %v2079 = vmul.f32 %v983, %v67
    %v2080 = vmul.f32 %v984, %v67
    %v2081 = vmul.f32 %v985, %v67
    %v2082 = vmul.f32 %v986, %v67
    %v2083 = vmul.f32 %v987, %v67
    %v2084 = vmul.f32 %v988, %v67
    %v2085 = vadd.f32 %v2069, %v2077
    %v2086 = vadd.f32 %v2070, %v2078
    %v2087 = vadd.f32 %v2071, %v2079
    %v2088 = vadd.f32 %v2072, %v2080
    %v2089 = vadd.f32 %v2073, %v2081
    %v2090 = vadd.f32 %v2074, %v2082
    %v2091 = vadd.f32 %v2075, %v2083
    %v2092 = vadd.f32 %v2076, %v2084
    %v2093 = vrot.slane %v2085, 4
    %v2094 = vadd.f32 %v2085, %v2093
    %v2095 = vrot.slane %v2094, 2
    %v2096 = vadd.f32 %v2094, %v2095
    %v2097 = vrot.slane %v2096, 1
    %v2098 = vadd.f32 %v2096, %v2097
    %v2099 = vrot.slane %v2086, 4
    %v2100 = vadd.f32 %v2086, %v2099
    %v2101 = vrot.slane %v2100, 2
    %v2102 = vadd.f32 %v2100, %v2101
    %v2103 = vrot.slane %v2102, 1
    %v2104 = vadd.f32 %v2102, %v2103
    %v2105 = vrot.slane %v2087, 4
    %v2106 = vadd.f32 %v2087, %v2105
    %v2107 = vrot.slane %v2106, 2
    %v2108 = vadd.f32 %v2106, %v2107
    %v2109 = vrot.slane %v2108, 1
    %v2110 = vadd.f32 %v2108, %v2109
    %v2111 = vrot.slane %v2088, 4
    %v2112 = vadd.f32 %v2088, %v2111
    %v2113 = vrot.slane %v2112, 2
    %v2114 = vadd.f32 %v2112, %v2113
    %v2115 = vrot.slane %v2114, 1
    %v2116 = vadd.f32 %v2114, %v2115
    %v2117 = vrot.slane %v2089, 4
    %v2118 = vadd.f32 %v2089, %v2117
    %v2119 = vrot.slane %v2118, 2
    %v2120 = vadd.f32 %v2118, %v2119
    %v2121 = vrot.slane %v2120, 1
    %v2122 = vadd.f32 %v2120, %v2121
    %v2123 = vrot.slane %v2090, 4
    %v2124 = vadd.f32 %v2090, %v2123
    %v2125 = vrot.slane %v2124, 2
    %v2126 = vadd.f32 %v2124, %v2125
    %v2127 = vrot.slane %v2126, 1
    %v2128 = vadd.f32 %v2126, %v2127
    %v2129 = vrot.slane %v2091, 4
    %v2130 = vadd.f32 %v2091, %v2129
    %v2131 = vrot.slane %v2130, 2
    %v2132 = vadd.f32 %v2130, %v2131
    %v2133 = vrot.slane %v2132, 1
    %v2134 = vadd.f32 %v2132, %v2133
    %v2135 = vrot.slane %v2092, 4
    %v2136 = vadd.f32 %v2092, %v2135
    %v2137 = vrot.slane %v2136, 2
    %v2138 = vadd.f32 %v2136, %v2137
    %v2139 = vrot.slane %v2138, 1
    %v2140 = vadd.f32 %v2138, %v2139
    %v2141 = vmul.f32 %v1018, 0.015625
    %v2142 = vmul.f32 %v1024, 0.015625
    %v2143 = vmul.f32 %v1030, 0.015625
    %v2144 = vmul.f32 %v1036, 0.015625
    %v2145 = vmul.f32 %v1042, 0.015625
    %v2146 = vmul.f32 %v1048, 0.015625
    %v2147 = vmul.f32 %v1054, 0.015625
    %v2148 = vmul.f32 %v1060, 0.015625
    %v2149 = vmul.f32 %v1162, 0.015625
    %v2150 = vmul.f32 %v1168, 0.015625
    %v2151 = vmul.f32 %v1174, 0.015625
    %v2152 = vmul.f32 %v1180, 0.015625
    %v2153 = vmul.f32 %v1186, 0.015625
    %v2154 = vmul.f32 %v1192, 0.015625
    %v2155 = vmul.f32 %v1198, 0.015625
    %v2156 = vmul.f32 %v1204, 0.015625
    %v2157 = vmul.f32 %v1306, 0.015625
    %v2158 = vmul.f32 %v1312, 0.015625
    %v2159 = vmul.f32 %v1318, 0.015625
    %v2160 = vmul.f32 %v1324, 0.015625
    %v2161 = vmul.f32 %v1330, 0.015625
    %v2162 = vmul.f32 %v1336, 0.015625
    %v2163 = vmul.f32 %v1342, 0.015625
    %v2164 = vmul.f32 %v1348, 0.015625
    %v2165 = vmul.f32 %v1450, 0.015625
    %v2166 = vmul.f32 %v1456, 0.015625
    %v2167 = vmul.f32 %v1462, 0.015625
    %v2168 = vmul.f32 %v1468, 0.015625
    %v2169 = vmul.f32 %v1474, 0.015625
    %v2170 = vmul.f32 %v1480, 0.015625
    %v2171 = vmul.f32 %v1486, 0.015625
    %v2172 = vmul.f32 %v1492, 0.015625
    %v2173 = vmul.f32 %v1594, 0.015625
    %v2174 = vmul.f32 %v1600, 0.015625
    %v2175 = vmul.f32 %v1606, 0.015625
    %v2176 = vmul.f32 %v1612, 0.015625
    %v2177 = vmul.f32 %v1618, 0.015625
    %v2178 = vmul.f32 %v1624, 0.015625
    %v2179 = vmul.f32 %v1630, 0.015625
    %v2180 = vmul.f32 %v1636, 0.015625
    %v2181 = vmul.f32 %v1738, 0.015625
    %v2182 = vmul.f32 %v1744, 0.015625
    %v2183 = vmul.f32 %v1750, 0.015625
    %v2184 = vmul.f32 %v1756, 0.015625
    %v2185 = vmul.f32 %v1762, 0.015625
    %v2186 = vmul.f32 %v1768, 0.015625
    %v2187 = vmul.f32 %v1774, 0.015625
    %v2188 = vmul.f32 %v1780, 0.015625
    %v2189 = vmul.f32 %v1882, 0.015625
    %v2190 = vmul.f32 %v1888, 0.015625
    %v2191 = vmul.f32 %v1894, 0.015625
    %v2192 = vmul.f32 %v1900, 0.015625
    %v2193 = vmul.f32 %v1906, 0.015625
    %v2194 = vmul.f32 %v1912, 0.015625
    %v2195 = vmul.f32 %v1918, 0.015625
    %v2196 = vmul.f32 %v1924, 0.015625
    %v2197 = vmul.f32 %v2026, 0.015625
    %v2198 = vmul.f32 %v2032, 0.015625
    %v2199 = vmul.f32 %v2038, 0.015625
    %v2200 = vmul.f32 %v2044, 0.015625
    %v2201 = vmul.f32 %v2050, 0.015625
    %v2202 = vmul.f32 %v2056, 0.015625
    %v2203 = vmul.f32 %v2062, 0.015625
    %v2204 = vmul.f32 %v2068, 0.015625
    %v2205 = vmul.f32 %v1090, 0.015625
    %v2206 = vmul.f32 %v1096, 0.015625
    %v2207 = vmul.f32 %v1102, 0.015625
    %v2208 = vmul.f32 %v1108, 0.015625
    %v2209 = vmul.f32 %v1114, 0.015625
    %v2210 = vmul.f32 %v1120, 0.015625
    %v2211 = vmul.f32 %v1126, 0.015625
    %v2212 = vmul.f32 %v1132, 0.015625
    %v2213 = vmul.f32 %v1234, 0.015625
    %v2214 = vmul.f32 %v1240, 0.015625
    %v2215 = vmul.f32 %v1246, 0.015625
    %v2216 = vmul.f32 %v1252, 0.015625
    %v2217 = vmul.f32 %v1258, 0.015625
    %v2218 = vmul.f32 %v1264, 0.015625
    %v2219 = vmul.f32 %v1270, 0.015625
    %v2220 = vmul.f32 %v1276, 0.015625
    %v2221 = vmul.f32 %v1378, 0.015625
    %v2222 = vmul.f32 %v1384, 0.015625
    %v2223 = vmul.f32 %v1390, 0.015625
    %v2224 = vmul.f32 %v1396, 0.015625
    %v2225 = vmul.f32 %v1402, 0.015625
    %v2226 = vmul.f32 %v1408, 0.015625
    %v2227 = vmul.f32 %v1414, 0.015625
    %v2228 = vmul.f32 %v1420, 0.015625
    %v2229 = vmul.f32 %v1522, 0.015625
    %v2230 = vmul.f32 %v1528, 0.015625
    %v2231 = vmul.f32 %v1534, 0.015625
    %v2232 = vmul.f32 %v1540, 0.015625
    %v2233 = vmul.f32 %v1546, 0.015625
    %v2234 = vmul.f32 %v1552, 0.015625
    %v2235 = vmul.f32 %v1558, 0.015625
    %v2236 = vmul.f32 %v1564, 0.015625
    %v2237 = vmul.f32 %v1666, 0.015625
    %v2238 = vmul.f32 %v1672, 0.015625
    %v2239 = vmul.f32 %v1678, 0.015625
    %v2240 = vmul.f32 %v1684, 0.015625
    %v2241 = vmul.f32 %v1690, 0.015625
    %v2242 = vmul.f32 %v1696, 0.015625
    %v2243 = vmul.f32 %v1702, 0.015625
    %v2244 = vmul.f32 %v1708, 0.015625
    %v2245 = vmul.f32 %v1810, 0.015625
    %v2246 = vmul.f32 %v1816, 0.015625
    %v2247 = vmul.f32 %v1822, 0.015625
    %v2248 = vmul.f32 %v1828, 0.015625
    %v2249 = vmul.f32 %v1834, 0.015625
    %v2250 = vmul.f32 %v1840, 0.015625
    %v2251 = vmul.f32 %v1846, 0.015625
    %v2252 = vmul.f32 %v1852, 0.015625
    %v2253 = vmul.f32 %v1954, 0.015625
    %v2254 = vmul.f32 %v1960, 0.015625
    %v2255 = vmul.f32 %v1966, 0.015625
    %v2256 = vmul.f32 %v1972, 0.015625
    %v2257 = vmul.f32 %v1978, 0.015625
    %v2258 = vmul.f32 %v1984, 0.015625
    %v2259 = vmul.f32 %v1990, 0.015625
    %v2260 = vmul.f32 %v1996, 0.015625
    %v2261 = vmul.f32 %v2098, 0.015625
    %v2262 = vmul.f32 %v2104, 0.015625
    %v2263 = vmul.f32 %v2110, 0.015625
    %v2264 = vmul.f32 %v2116, 0.015625
    %v2265 = vmul.f32 %v2122, 0.015625
    %v2266 = vmul.f32 %v2128, 0.015625
    %v2267 = vmul.f32 %v2134, 0.015625
    %v2268 = vmul.f32 %v2140, 0.015625
    %v2397 = vrot.slane %v2142, 7
    %vm2398 = vcmask 1041409
    %v2399 = vsel %vm2398, %v2397, %v2141
    %v2400 = vrot.slane %v2143, 6
    %vm2401 = vcmask 1042434
    %v2402 = vsel %vm2401, %v2400, %v2399
    %v2403 = vrot.slane %v2144, 5
    %vm2404 = vcmask 1043459
    %v2405 = vsel %vm2404, %v2403, %v2402
    %v2406 = vrot.slane %v2145, 4
    %vm2407 = vcmask 1044484
    %v2408 = vsel %vm2407, %v2406, %v2405
    %v2409 = vrot.slane %v2146, 3
    %vm2410 = vcmask 1045509
    %v2411 = vsel %vm2410, %v2409, %v2408
    %v2412 = vrot.slane %v2147, 2
    %vm2413 = vcmask 1046534
    %v2414 = vsel %vm2413, %v2412, %v2411
    %v2415 = vrot.slane %v2148, 1
    %vm2416 = vcmask 1047559
    %v2417 = vsel %vm2416, %v2415, %v2414
    %v2418 = vrot.slane %v2150, 7
    %v2419 = vsel %vm2398, %v2418, %v2149
    %v2420 = vrot.slane %v2151, 6
    %v2421 = vsel %vm2401, %v2420, %v2419
    %v2422 = vrot.slane %v2152, 5
    %v2423 = vsel %vm2404, %v2422, %v2421
    %v2424 = vrot.slane %v2153, 4
    %v2425 = vsel %vm2407, %v2424, %v2423
    %v2426 = vrot.slane %v2154, 3
    %v2427 = vsel %vm2410, %v2426, %v2425
    %v2428 = vrot.slane %v2155, 2
    %v2429 = vsel %vm2413, %v2428, %v2427
    %v2430 = vrot.slane %v2156, 1
    %v2431 = vsel %vm2416, %v2430, %v2429
    %v2432 = vrot.slane %v2158, 7
    %v2433 = vsel %vm2398, %v2432, %v2157
    %v2434 = vrot.slane %v2159, 6
    %v2435 = vsel %vm2401, %v2434, %v2433
    %v2436 = vrot.slane %v2160, 5
    %v2437 = vsel %vm2404, %v2436, %v2435
    %v2438 = vrot.slane %v2161, 4
    %v2439 = vsel %vm2407, %v2438, %v2437
    %v2440 = vrot.slane %v2162, 3
    %v2441 = vsel %vm2410, %v2440, %v2439
    %v2442 = vrot.slane %v2163, 2
    %v2443 = vsel %vm2413, %v2442, %v2441
    %v2444 = vrot.slane %v2164, 1
    %v2445 = vsel %vm2416, %v2444, %v2443
    %v2446 = vrot.slane %v2166, 7
    %v2447 = vsel %vm2398, %v2446, %v2165
    %v2448 = vrot.slane %v2167, 6
    %v2449 = vsel %vm2401, %v2448, %v2447
    %v2450 = vrot.slane %v2168, 5
    %v2451 = vsel %vm2404, %v2450, %v2449
    %v2452 = vrot.slane %v2169, 4
    %v2453 = vsel %vm2407, %v2452, %v2451
    %v2454 = vrot.slane %v2170, 3
    %v2455 = vsel %vm2410, %v2454, %v2453
    %v2456 = vrot.slane %v2171, 2
    %v2457 = vsel %vm2413, %v2456, %v2455
    %v2458 = vrot.slane %v2172, 1
    %v2459 = vsel %vm2416, %v2458, %v2457
    %v2460 = vrot.slane %v2174, 7
    %v2461 = vsel %vm2398, %v2460, %v2173
    %v2462 = vrot.slane %v2175, 6
    %v2463 = vsel %vm2401, %v2462, %v2461
    %v2464 = vrot.slane %v2176, 5
    %v2465 = vsel %vm2404, %v2464, %v2463
    %v2466 = vrot.slane %v2177, 4
    %v2467 = vsel %vm2407, %v2466, %v2465
    %v2468 = vrot.slane %v2178, 3
    %v2469 = vsel %vm2410, %v2468, %v2467
    %v2470 = vrot.slane %v2179, 2
    %v2471 = vsel %vm2413, %v2470, %v2469
    %v2472 = vrot.slane %v2180, 1
    %v2473 = vsel %vm2416, %v2472, %v2471
    %v2474 = vrot.slane %v2182, 7
    %v2475 = vsel %vm2398, %v2474, %v2181
    %v2476 = vrot.slane %v2183, 6
    %v2477 = vsel %vm2401, %v2476, %v2475
    %v2478 = vrot.slane %v2184, 5
    %v2479 = vsel %vm2404, %v2478, %v2477
    %v2480 = vrot.slane %v2185, 4
    %v2481 = vsel %vm2407, %v2480, %v2479
    %v2482 = vrot.slane %v2186, 3
    %v2483 = vsel %vm2410, %v2482, %v2481
    %v2484 = vrot.slane %v2187, 2
    %v2485 = vsel %vm2413, %v2484, %v2483
    %v2486 = vrot.slane %v2188, 1
    %v2487 = vsel %vm2416, %v2486, %v2485
    %v2488 = vrot.slane %v2190, 7
    %v2489 = vsel %vm2398, %v2488, %v2189
    %v2490 = vrot.slane %v2191, 6
    %v2491 = vsel %vm2401, %v2490, %v2489
    %v2492 = vrot.slane %v2192, 5
    %v2493 = vsel %vm2404, %v2492, %v2491
    %v2494 = vrot.slane %v2193, 4
    %v2495 = vsel %vm2407, %v2494, %v2493
    %v2496 = vrot.slane %v2194, 3
    %v2497 = vsel %vm2410, %v2496, %v2495
    %v2498 = vrot.slane %v2195, 2
    %v2499 = vsel %vm2413, %v2498, %v2497
    %v2500 = vrot.slane %v2196, 1
    %v2501 = vsel %vm2416, %v2500, %v2499
    %v2502 = vrot.slane %v2198, 7
    %v2503 = vsel %vm2398, %v2502, %v2197
    %v2504 = vrot.slane %v2199, 6
    %v2505 = vsel %vm2401, %v2504, %v2503
    %v2506 = vrot.slane %v2200, 5
    %v2507 = vsel %vm2404, %v2506, %v2505
    %v2508 = vrot.slane %v2201, 4
    %v2509 = vsel %vm2407, %v2508, %v2507
    %v2510 = vrot.slane %v2202, 3
    %v2511 = vsel %vm2410, %v2510, %v2509
    %v2512 = vrot.slane %v2203, 2
    %v2513 = vsel %vm2413, %v2512, %v2511
    %v2514 = vrot.slane %v2204, 1
    %v2515 = vsel %vm2416, %v2514, %v2513
    %v2516 = vrot.slane %v2206, 7
    %v2517 = vsel %vm2398, %v2516, %v2205
    %v2518 = vrot.slane %v2207, 6
    %v2519 = vsel %vm2401, %v2518, %v2517
    %v2520 = vrot.slane %v2208, 5
    %v2521 = vsel %vm2404, %v2520, %v2519
    %v2522 = vrot.slane %v2209, 4
    %v2523 = vsel %vm2407, %v2522, %v2521
    %v2524 = vrot.slane %v2210, 3
    %v2525 = vsel %vm2410, %v2524, %v2523
    %v2526 = vrot.slane %v2211, 2
    %v2527 = vsel %vm2413, %v2526, %v2525
    %v2528 = vrot.slane %v2212, 1
    %v2529 = vsel %vm2416, %v2528, %v2527
    %v2530 = vrot.slane %v2214, 7
    %v2531 = vsel %vm2398, %v2530, %v2213
    %v2532 = vrot.slane %v2215, 6
    %v2533 = vsel %vm2401, %v2532, %v2531
    %v2534 = vrot.slane %v2216, 5
    %v2535 = vsel %vm2404, %v2534, %v2533
    %v2536 = vrot.slane %v2217, 4
    %v2537 = vsel %vm2407, %v2536, %v2535
    %v2538 = vrot.slane %v2218, 3
    %v2539 = vsel %vm2410, %v2538, %v2537
    %v2540 = vrot.slane %v2219, 2
    %v2541 = vsel %vm2413, %v2540, %v2539
    %v2542 = vrot.slane %v2220, 1
    %v2543 = vsel %vm2416, %v2542, %v2541
    %v2544 = vrot.slane %v2222, 7
    %v2545 = vsel %vm2398, %v2544, %v2221
    %v2546 = vrot.slane %v2223, 6
    %v2547 = vsel %vm2401, %v2546, %v2545
    %v2548 = vrot.slane %v2224, 5
    %v2549 = vsel %vm2404, %v2548, %v2547
    %v2550 = vrot.slane %v2225, 4
    %v2551 = vsel %vm2407, %v2550, %v2549
    %v2552 = vrot.slane %v2226, 3
    %v2553 = vsel %vm2410, %v2552, %v2551
    %v2554 = vrot.slane %v2227, 2
    %v2555 = vsel %vm2413, %v2554, %v2553
    %v2556 = vrot.slane %v2228, 1
    %v2557 = vsel %vm2416, %v2556, %v2555
    %v2558 = vrot.slane %v2230, 7
    %v2559 = vsel %vm2398, %v2558, %v2229
    %v2560 = vrot.slane %v2231, 6
    %v2561 = vsel %vm2401, %v2560, %v2559
    %v2562 = vrot.slane %v2232, 5
    %v2563 = vsel %vm2404, %v2562, %v2561
    %v2564 = vrot.slane %v2233, 4
    %v2565 = vsel %vm2407, %v2564, %v2563
    %v2566 = vrot.slane %v2234, 3
    %v2567 = vsel %vm2410, %v2566, %v2565
    %v2568 = vrot.slane %v2235, 2
    %v2569 = vsel %vm2413, %v2568, %v2567
    %v2570 = vrot.slane %v2236, 1
    %v2571 = vsel %vm2416, %v2570, %v2569
    %v2572 = vrot.slane %v2238, 7
    %v2573 = vsel %vm2398, %v2572, %v2237
    %v2574 = vrot.slane %v2239, 6
    %v2575 = vsel %vm2401, %v2574, %v2573
    %v2576 = vrot.slane %v2240, 5
    %v2577 = vsel %vm2404, %v2576, %v2575
    %v2578 = vrot.slane %v2241, 4
    %v2579 = vsel %vm2407, %v2578, %v2577
    %v2580 = vrot.slane %v2242, 3
    %v2581 = vsel %vm2410, %v2580, %v2579
    %v2582 = vrot.slane %v2243, 2
    %v2583 = vsel %vm2413, %v2582, %v2581
    %v2584 = vrot.slane %v2244, 1
    %v2585 = vsel %vm2416, %v2584, %v2583
    %v2586 = vrot.slane %v2246, 7
    %v2587 = vsel %vm2398, %v2586, %v2245
    %v2588 = vrot.slane %v2247, 6
    %v2589 = vsel %vm2401, %v2588, %v2587
    %v2590 = vrot.slane %v2248, 5
    %v2591 = vsel %vm2404, %v2590, %v2589
    %v2592 = vrot.slane %v2249, 4
    %v2593 = vsel %vm2407, %v2592, %v2591
    %v2594 = vrot.slane %v2250, 3
    %v2595 = vsel %vm2410, %v2594, %v2593
    %v2596 = vrot.slane %v2251, 2
    %v2597 = vsel %vm2413, %v2596, %v2595
    %v2598 = vrot.slane %v2252, 1
    %v2599 = vsel %vm2416, %v2598, %v2597
    %v2600 = vrot.slane %v2254, 7
    %v2601 = vsel %vm2398, %v2600, %v2253
    %v2602 = vrot.slane %v2255, 6
    %v2603 = vsel %vm2401, %v2602, %v2601
    %v2604 = vrot.slane %v2256, 5
    %v2605 = vsel %vm2404, %v2604, %v2603
    %v2606 = vrot.slane %v2257, 4
    %v2607 = vsel %vm2407, %v2606, %v2605
    %v2608 = vrot.slane %v2258, 3
    %v2609 = vsel %vm2410, %v2608, %v2607
    %v2610 = vrot.slane %v2259, 2
    %v2611 = vsel %vm2413, %v2610, %v2609
    %v2612 = vrot.slane %v2260, 1
    %v2613 = vsel %vm2416, %v2612, %v2611
    %v2614 = vrot.slane %v2262, 7
    %v2615 = vsel %vm2398, %v2614, %v2261
    %v2616 = vrot.slane %v2263, 6
    %v2617 = vsel %vm2401, %v2616, %v2615
    %v2618 = vrot.slane %v2264, 5
    %v2619 = vsel %vm2404, %v2618, %v2617
    %v2620 = vrot.slane %v2265, 4
    %v2621 = vsel %vm2407, %v2620, %v2619
    %v2622 = vrot.slane %v2266, 3
    %v2623 = vsel %vm2410, %v2622, %v2621
    %v2624 = vrot.slane %v2267, 2
    %v2625 = vsel %vm2413, %v2624, %v2623
    %v2626 = vrot.slane %v2268, 1
    %v2627 = vsel %vm2416, %v2626, %v2625
    %2644 = vst [vmem:[%s2] sm:$0xff] %v2417
    %2645 = vst [vmem:[%s2 + $0x8] sm:$0x1] 0.0
    %2646 = vst [vmem:[%s2 + $0x10] sm:$0xff] %v2431
    %2647 = vst [vmem:[%s2 + $0x18] sm:$0x1] 0.0
    %2648 = vst [vmem:[%s2 + $0x20] sm:$0xff] %v2445
    %2649 = vst [vmem:[%s2 + $0x28] sm:$0x1] 0.0
    %2650 = vst [vmem:[%s2 + $0x30] sm:$0xff] %v2459
    %2651 = vst [vmem:[%s2 + $0x38] sm:$0x1] 0.0
    %2652 = vst [vmem:[%s2 + $0x40] sm:$0xff] %v2473
    %2653 = vst [vmem:[%s2 + $0x48] sm:$0x1] 0.0
    %2654 = vst [vmem:[%s2 + $0x50] sm:$0xff] %v2487
    %2655 = vst [vmem:[%s2 + $0x58] sm:$0x1] 0.0
    %2656 = vst [vmem:[%s2 + $0x60] sm:$0xff] %v2501
    %2657 = vst [vmem:[%s2 + $0x68] sm:$0x1] 0.0
    %2658 = vst [vmem:[%s2 + $0x70] sm:$0xff] %v2515
    %2659 = vst [vmem:[%s2 + $0x78] sm:$0x1] 0.0
    %2660 = vst [vmem:[%s2 + $0x80] sm:$0xff] %v2529
    %2661 = vst [vmem:[%s2 + $0x88] sm:$0x1] 0.0
    %2662 = vst [vmem:[%s2 + $0x90] sm:$0xff] %v2543
    %2663 = vst [vmem:[%s2 + $0x98] sm:$0x1] 0.0
    %2664 = vst [vmem:[%s2 + $0xa0] sm:$0xff] %v2557
    %2665 = vst [vmem:[%s2 + $0xa8] sm:$0x1] 0.0
    %2666 = vst [vmem:[%s2 + $0xb0] sm:$0xff] %v2571
    %2667 = vst [vmem:[%s2 + $0xb8] sm:$0x1] 0.0
    %2668 = vst [vmem:[%s2 + $0xc0] sm:$0xff] %v2585
    %2669 = vst [vmem:[%s2 + $0xc8] sm:$0x1] 0.0
    %2670 = vst [vmem:[%s2 + $0xd0] sm:$0xff] %v2599
    %2671 = vst [vmem:[%s2 + $0xd8] sm:$0x1] 0.0
    %2672 = vst [vmem:[%s2 + $0xe0] sm:$0xff] %v2613
    %2673 = vst [vmem:[%s2 + $0xe8] sm:$0x1] 0.0
    %2674 = vst [vmem:[%s2 + $0xf0] sm:$0xff] %v2627
    %2675 = vst [vmem:[%s2 + $0xf8] sm:$0x1] 0.0
    // Predicated region
    $region18: #{tpu_custom_call.1} parent=1 // pred_check
      _
    $region19: #{tpu_custom_call.1} parent=1 // pred_check_branch
      %2677 = sbr.rel (0) target = $region21
    $region20: #{tpu_custom_call.1} parent=1 // pred_region
      _
    $region21: #{tpu_custom_call.1} parent=1 // pred_fallthru
      _
    // Predicated region
    $region22: #{tpu_custom_call.1} parent=1 // pred_check
      _
    $region23: #{tpu_custom_call.1} parent=1 // pred_check_branch
      %2679 = sbr.rel (0) target = $region25
    $region24: #{tpu_custom_call.1} parent=1 // pred_region
      _
    $region25: #{tpu_custom_call.1} parent=1 // pred_fallthru
      _
    %2680 = vsyncpa [#allocation3], 1
    %2681 = vsyncpa [#allocation5], 1

</llo_original>
